<compile_context>
chip_gen: v5e
topology: v5e:2x2
jax: 0.10.0
libtpu: 0.0.40
codegen_flags: <defaults>
</compile_context>

<pallas_src>
import functools

import jax
import jax.numpy as jnp
from jax import lax
from jax.experimental import pallas as pl
from jax.experimental.pallas import tpu as pltpu


def _layernorm(x, gamma, beta, eps=1e-5):
    mu = jnp.mean(x, axis=-1, keepdims=True)
    var = jnp.mean((x - mu) ** 2, axis=-1, keepdims=True)
    return (x - mu) * lax.rsqrt(var + eps) * gamma + beta


def _gelu_exact(x):
    # PyTorch nn.GELU() default = exact erf formulation.
    return 0.5 * x * (1.0 + lax.erf(x * 0.7071067811865476))


def encoder_layer_kernel(
    x_ref, wqkv_ref, wo_ref, w1_ref, w2_ref, vec_ref, b1_ref,   # inputs
    xout_ref, probs_ref,                                        # outputs
    x_carry, attn_slab,                                         # VMEM scratch
    *, num_heads, head_dim, hidden_size,
):
    l = pl.program_id(1)
    H = hidden_size
    hd = head_dim

    # Layer 0: load this batch row's input into the resident f32 carry.
    @pl.when(l == 0)
    def _():
        x_carry[...] = x_ref[0].astype(jnp.float32)

    x = x_carry[...]                                    # (S, H) f32
    vec = vec_ref[0]                                    # (9, H) f32
    bq, bk, bv, bo = vec[0:1], vec[1:2], vec[2:3], vec[3:4]
    ln1_g, ln1_b = vec[4:5], vec[5:6]
    ln2_g, ln2_b = vec[6:7], vec[7:8]
    b2 = vec[8:9]

    # ---- LayerNorm 1 (f32 stats) ----
    xn16 = _layernorm(x, ln1_g, ln1_b).astype(jnp.bfloat16)

    # ---- fused Q/K/V projection: one lane-dense (S,H) x (H,3H) MXU matmul ----
    qkv = jnp.dot(xn16, wqkv_ref[0], preferred_element_type=jnp.float32)  # (S, 3H)
    q16 = (qkv[:, 0 * H:1 * H] + bq).astype(jnp.bfloat16)   # cast once, reuse below
    k16 = (qkv[:, 1 * H:2 * H] + bk).astype(jnp.bfloat16)
    v16 = (qkv[:, 2 * H:3 * H] + bv).astype(jnp.bfloat16)

    # ---- batched multi-head attention: all heads in two batched MXU einsums ----
    qh = jnp.stack([q16[:, h * hd:(h + 1) * hd] for h in range(num_heads)], axis=0)
    kh = jnp.stack([k16[:, h * hd:(h + 1) * hd] for h in range(num_heads)], axis=0)
    vh = jnp.stack([v16[:, h * hd:(h + 1) * hd] for h in range(num_heads)], axis=0)

    scale = jnp.float32(1.0 / (hd ** 0.5))
    s = jnp.einsum("hqd,hkd->hqk", qh, kh,
                   preferred_element_type=jnp.float32) * scale      # (nh, S, S)
    s = s - jnp.max(s, axis=-1, keepdims=True)
    e = jnp.exp(s)
    p = e / jnp.sum(e, axis=-1, keepdims=True)                      # exact softmax, f32

    # Single store of all heads' probs (lane dim = S; keep S a multiple of 128
    # at production sizes, or pass probs_dtype=bf16, to keep this lane-dense).
    probs_ref[0, 0] = p.astype(probs_ref.dtype)

    o = jnp.einsum("hqk,hkd->hqd", p.astype(jnp.bfloat16), vh,
                   preferred_element_type=jnp.float32)              # (nh, S, hd)
    for h in range(num_heads):      # concat heads into the (S, H) VMEM slab
        attn_slab[:, h * hd:(h + 1) * hd] = o[h].astype(attn_slab.dtype)

    # ---- output projection + residual 1 ----
    attn = jnp.dot(attn_slab[...], wo_ref[0],
                   preferred_element_type=jnp.float32) + bo
    x1 = x + attn

    # ---- LayerNorm 2 + FFN (Linear -> exact GELU -> Linear) + residual 2 ----
    x2n = _layernorm(x1, ln2_g, ln2_b).astype(jnp.bfloat16)
    h1 = jnp.dot(x2n, w1_ref[0], preferred_element_type=jnp.float32) + b1_ref[0]
    h1 = _gelu_exact(h1)
    h2 = jnp.dot(h1.astype(jnp.bfloat16), w2_ref[0],
                 preferred_element_type=jnp.float32) + b2
    x_new = x1 + h2

    # Keep the residual stream resident for the next layer.
    x_carry[...] = x_new

    @pl.when(l == pl.num_programs(1) - 1)
    def _():
        xout_ref[0] = x_new.astype(xout_ref.dtype)


def _vmem_limit_bytes(S, H, I, num_heads):
    # Working-set estimate that already counts double-buffering of pipelined blocks.
    weight_blk = 2 * 2 * (H * 3 * H + H * H + H * I + I * H)        # bf16, x2 buffers
    vec_blk = 2 * 4 * (9 * H + I)
    io_blk = 2 * 4 * (2 * S * H) + 2 * 4 * num_heads * S * S        # x in/out + probs
    scratch = 4 * S * H + 2 * S * H
    transient = 4 * (4 * S * 3 * H + 4 * num_heads * S * S + 2 * S * I + 4 * S * H)
    est = weight_blk + vec_blk + io_blk + scratch + transient
    try:
        cap = pltpu.get_tpu_info().vmem_capacity_bytes
    except Exception:                                               # pragma: no cover
        cap = 64 * 2 ** 20                                          # safe on all gens
    # ~80% of physical VMEM (~51 MiB v7x, ~102 MiB v5e/v6e), never more than the
    # working set (+50% headroom) actually needs, never less than 32 MiB.
    return int(min(0.8 * cap, max(32 * 2 ** 20, 1.5 * est)))


def encoder_forward(x, params, *, num_heads, probs_dtype=jnp.float32):
    B, S, H = x.shape
    L = params["wqkv"].shape[0]
    I = params["w1"].shape[2]
    assert H % num_heads == 0, "hidden_size must be divisible by num_heads"
    hd = H // num_heads

    kernel = functools.partial(
        encoder_layer_kernel, num_heads=num_heads, head_dim=hd, hidden_size=H)

    in_specs = [
        pl.BlockSpec((1, S, H), lambda b, l: (b, 0, 0)),       # x (constant over l)
        pl.BlockSpec((1, H, 3 * H), lambda b, l: (l, 0, 0)),   # wqkv (prefetched over l)
        pl.BlockSpec((1, H, H), lambda b, l: (l, 0, 0)),       # wo
        pl.BlockSpec((1, H, I), lambda b, l: (l, 0, 0)),       # w1
        pl.BlockSpec((1, I, H), lambda b, l: (l, 0, 0)),       # w2
        pl.BlockSpec((1, 9, H), lambda b, l: (l, 0, 0)),       # packed biases / LN params
        pl.BlockSpec((1, 1, I), lambda b, l: (l, 0, 0)),       # b1
    ]
    out_specs = [
        pl.BlockSpec((1, S, H), lambda b, l: (b, 0, 0)),       # x out (const over l)
        pl.BlockSpec((1, 1, num_heads, S, S), lambda b, l: (l, b, 0, 0, 0)),
    ]
    out_shape = [
        jax.ShapeDtypeStruct((B, S, H), x.dtype),
        jax.ShapeDtypeStruct((L, B, num_heads, S, S), probs_dtype),
    ]

    xout, probs_all = pl.pallas_call(
        kernel,
        grid=(B, L),
        in_specs=in_specs,
        out_specs=out_specs,
        out_shape=out_shape,
        scratch_shapes=[
            pltpu.VMEM((S, H), jnp.float32),    # resident residual-stream carry
            pltpu.VMEM((S, H), jnp.bfloat16),   # concatenated per-head attention output
        ],
        compiler_params=pltpu.CompilerParams(
            dimension_semantics=("parallel", "arbitrary"),
            vmem_limit_bytes=_vmem_limit_bytes(S, H, I, num_heads)),
    )(x, params["wqkv"], params["wo"], params["w1"], params["w2"],
      params["vecs"], params["b1"])

    # Per-layer list, matching the PyTorch Encoder return signature.
    return xout, [probs_all[l] for l in range(L)]


def init_encoder_params(key, hidden_size, intermediate_size, num_layers):
    H, I, L = hidden_size, intermediate_size, num_layers
    ks = jax.random.split(key, 12)

    def w(k, shape, scale=0.02):
        return scale * jax.random.normal(k, shape, dtype=jnp.float32)

    wq, wk, wv = w(ks[0], (L, H, H)), w(ks[1], (L, H, H)), w(ks[2], (L, H, H))
    wo = w(ks[3], (L, H, H))
    w1 = w(ks[4], (L, H, I))
    w2 = w(ks[5], (L, I, H))
    bq, bk, bv = w(ks[6], (L, H)), w(ks[7], (L, H)), w(ks[8], (L, H))
    bo = w(ks[9], (L, H))
    b1 = w(ks[10], (L, I))
    b2 = w(ks[11], (L, H))
    ones = jnp.ones((L, H), jnp.float32)
    zeros = jnp.zeros((L, H), jnp.float32)

    # Packed (L, 9, H) slab: rows = [bq, bk, bv, bo, ln1_g, ln1_b, ln2_g, ln2_b, b2].
    vecs = jnp.stack([bq, bk, bv, bo, ones, zeros, ones, zeros, b2], axis=1)

    return {
        # Weights stored (in, out); cast to bf16 ONCE here (no per-call casts).
        "wqkv": jnp.concatenate([wq, wk, wv], axis=-1).astype(jnp.bfloat16),  # (L,H,3H)
        "wo": wo.astype(jnp.bfloat16),
        "w1": w1.astype(jnp.bfloat16),
        "w2": w2.astype(jnp.bfloat16),
        "vecs": vecs,                     # f32: biases + LayerNorm params
        "b1": b1.reshape(L, 1, I),        # f32
    }


if __name__ == "__main__":
    # Small config consistent with Encoder(hidden_size, num_heads,
    # intermediate_size, num_layers): hidden=32, heads=4, intermediate=64, layers=2
    B, S, H = 2, 8, 32
    num_heads, intermediate_size, num_layers = 4, 64, 2

    key = jax.random.PRNGKey(0)
    kx, kp = jax.random.split(key)
    x = jax.random.normal(kx, (B, S, H), dtype=jnp.float32)
    params = init_encoder_params(kp, H, intermediate_size, num_layers)

    out, probs_list = encoder_forward(x, params, num_heads=num_heads)
    out = jax.block_until_ready(out)
    probs_list = [jax.block_until_ready(p) for p in probs_list]

    assert out.shape == (B, S, H)
    assert len(probs_list) == num_layers
    assert all(p.shape == (B, num_heads, S, S) for p in probs_list)
    print("KERNEL_OK")
</pallas_src>

<mosaic_0001>
module attributes {stable_mosaic.version = 11 : i64} {
  func.func @encoder_layer_kernel(%arg0: i32, %arg1: i32, %arg2: memref<1x8x32xf32, #tpu.memory_space<vmem>>, %arg3: memref<1x32x96xbf16, #tpu.memory_space<vmem>>, %arg4: memref<1x32x32xbf16, #tpu.memory_space<vmem>>, %arg5: memref<1x32x64xbf16, #tpu.memory_space<vmem>>, %arg6: memref<1x64x32xbf16, #tpu.memory_space<vmem>>, %arg7: memref<1x9x32xf32, #tpu.memory_space<vmem>>, %arg8: memref<1x1x64xf32, #tpu.memory_space<vmem>>, %arg9: memref<1x8x32xf32, #tpu.memory_space<vmem>>, %arg10: memref<1x1x4x8x8xf32, #tpu.memory_space<vmem>>, %arg11: memref<8x32xf32, #tpu.memory_space<vmem>>, %arg12: memref<8x32xbf16, #tpu.memory_space<vmem>>) attributes {dimension_semantics = [#tpu.dimension_semantics<parallel>, #tpu.dimension_semantics<arbitrary>], iteration_bounds = array<i64: 2, 2>, scalar_prefetch = 0 : i64, scratch_operands = 2 : i64, tpu.core_type = #tpu.core_type<tc>, window_params = [{transform_indices = @transform_0, window_bounds = array<i64: 1, 8, 32>}, {transform_indices = @transform_1, window_bounds = array<i64: 1, 32, 96>}, {transform_indices = @transform_2, window_bounds = array<i64: 1, 32, 32>}, {transform_indices = @transform_3, window_bounds = array<i64: 1, 32, 64>}, {transform_indices = @transform_4, window_bounds = array<i64: 1, 64, 32>}, {transform_indices = @transform_5, window_bounds = array<i64: 1, 9, 32>}, {transform_indices = @transform_6, window_bounds = array<i64: 1, 1, 64>}, {transform_indices = @transform_7, window_bounds = array<i64: 1, 8, 32>}, {transform_indices = @transform_8, window_bounds = array<i64: 1, 1, 4, 8, 8>}]} {
    %c0_i32 = arith.constant 0 : i32
    %0 = arith.cmpi eq, %arg1, %c0_i32 : i32
    %1 = arith.extui %0 : i1 to i32
    %c0_i32_0 = arith.constant 0 : i32
    %2 = arith.cmpi ne, %1, %c0_i32_0 : i32
    scf.if %2 {
      %c0_56 = arith.constant 0 : index
      %c0_57 = arith.constant 0 : index
      %c0_58 = arith.constant 0 : index
      %169 = vector.load %arg2[%c0_56, %c0_57, %c0_58] : memref<1x8x32xf32, #tpu.memory_space<vmem>>, vector<1x8x32xf32>
      %170 = vector.shape_cast %169 : vector<1x8x32xf32> to vector<8x32xf32>
      %c0_59 = arith.constant 0 : index
      %c0_60 = arith.constant 0 : index
      %171 = vector.load %arg11[%c0_59, %c0_60] : memref<8x32xf32, #tpu.memory_space<vmem>>, vector<8x32xf32>
      tpu.vector_store %arg11[%c0_59, %c0_60], %170 {strides = array<i32>} : memref<8x32xf32, #tpu.memory_space<vmem>>, vector<8x32xf32>,
    } else {
    }
    %c0 = arith.constant 0 : index
    %c0_1 = arith.constant 0 : index
    %3 = vector.load %arg11[%c0, %c0_1] : memref<8x32xf32, #tpu.memory_space<vmem>>, vector<8x32xf32>
    %c0_2 = arith.constant 0 : index
    %c0_3 = arith.constant 0 : index
    %c0_4 = arith.constant 0 : index
    %4 = vector.load %arg7[%c0_2, %c0_3, %c0_4] : memref<1x9x32xf32, #tpu.memory_space<vmem>>, vector<1x9x32xf32>
    %5 = vector.shape_cast %4 : vector<1x9x32xf32> to vector<9x32xf32>
    %6 = vector.extract_strided_slice %5 {offsets = [0, 0], sizes = [1, 32], strides = [1, 1]} : vector<9x32xf32> to vector<1x32xf32>
    %7 = vector.extract_strided_slice %5 {offsets = [1, 0], sizes = [1, 32], strides = [1, 1]} : vector<9x32xf32> to vector<1x32xf32>
    %8 = vector.extract_strided_slice %5 {offsets = [2, 0], sizes = [1, 32], strides = [1, 1]} : vector<9x32xf32> to vector<1x32xf32>
    %9 = vector.extract_strided_slice %5 {offsets = [3, 0], sizes = [1, 32], strides = [1, 1]} : vector<9x32xf32> to vector<1x32xf32>
    %10 = vector.extract_strided_slice %5 {offsets = [4, 0], sizes = [1, 32], strides = [1, 1]} : vector<9x32xf32> to vector<1x32xf32>
    %11 = vector.extract_strided_slice %5 {offsets = [5, 0], sizes = [1, 32], strides = [1, 1]} : vector<9x32xf32> to vector<1x32xf32>
    %12 = vector.extract_strided_slice %5 {offsets = [6, 0], sizes = [1, 32], strides = [1, 1]} : vector<9x32xf32> to vector<1x32xf32>
    %13 = vector.extract_strided_slice %5 {offsets = [7, 0], sizes = [1, 32], strides = [1, 1]} : vector<9x32xf32> to vector<1x32xf32>
    %14 = vector.extract_strided_slice %5 {offsets = [8, 0], sizes = [1, 32], strides = [1, 1]} : vector<9x32xf32> to vector<1x32xf32>
    %cst = arith.constant dense<0.000000e+00> : vector<8xf32>
    %15 = vector.multi_reduction <add>, %3, %cst [1] : vector<8x32xf32> to vector<8xf32>
    %16 = vector.shape_cast %15 : vector<8xf32> to vector<8x1xf32>
    %cst_5 = arith.constant 3.200000e+01 : f32
    %17 = vector.broadcast %cst_5 : f32 to vector<8x1xf32>
    %18 = arith.divf %16, %17 : vector<8x1xf32>
    %19 = vector.broadcast %18 : vector<8x1xf32> to vector<8x32xf32>
    %20 = arith.subf %3, %19 : vector<8x32xf32>
    %21 = arith.mulf %20, %20 : vector<8x32xf32>
    %cst_6 = arith.constant dense<0.000000e+00> : vector<8xf32>
    %22 = vector.multi_reduction <add>, %21, %cst_6 [1] : vector<8x32xf32> to vector<8xf32>
    %23 = vector.shape_cast %22 : vector<8xf32> to vector<8x1xf32>
    %cst_7 = arith.constant 3.200000e+01 : f32
    %24 = vector.broadcast %cst_7 : f32 to vector<8x1xf32>
    %25 = arith.divf %23, %24 : vector<8x1xf32>
    %26 = vector.broadcast %18 : vector<8x1xf32> to vector<8x32xf32>
    %27 = arith.subf %3, %26 : vector<8x32xf32>
    %cst_8 = arith.constant 9.99999974E-6 : f32
    %28 = vector.broadcast %cst_8 : f32 to vector<8x1xf32>
    %29 = arith.addf %25, %28 : vector<8x1xf32>
    %30 = math.rsqrt %29 : vector<8x1xf32>
    %31 = vector.broadcast %30 : vector<8x1xf32> to vector<8x32xf32>
    %32 = arith.mulf %27, %31 : vector<8x32xf32>
    %33 = vector.broadcast %10 : vector<1x32xf32> to vector<8x32xf32>
    %34 = arith.mulf %32, %33 : vector<8x32xf32>
    %35 = vector.broadcast %11 : vector<1x32xf32> to vector<8x32xf32>
    %36 = arith.addf %34, %35 : vector<8x32xf32>
    %37 = arith.truncf %36 : vector<8x32xf32> to vector<8x32xbf16>
    %c0_9 = arith.constant 0 : index
    %c0_10 = arith.constant 0 : index
    %c0_11 = arith.constant 0 : index
    %38 = vector.load %arg3[%c0_9, %c0_10, %c0_11] : memref<1x32x96xbf16, #tpu.memory_space<vmem>>, vector<1x32x96xbf16>
    %39 = vector.shape_cast %38 : vector<1x32x96xbf16> to vector<32x96xbf16>
    %cst_12 = arith.constant dense<0.000000e+00> : vector<8x96xf32>
    %40 = tpu.matmul %37, %39, %cst_12 {dimension_numbers = #tpu.dot_dimension_numbers<[1], [0], [0], [1], [0, 0, 1, 1], [], []>} : vector<8x32xbf16>, vector<32x96xbf16>, vector<8x96xf32> -> vector<8x96xf32>
    %41 = vector.extract_strided_slice %40 {offsets = [0, 0], sizes = [8, 32], strides = [1, 1]} : vector<8x96xf32> to vector<8x32xf32>
    %42 = vector.broadcast %6 : vector<1x32xf32> to vector<8x32xf32>
    %43 = arith.addf %41, %42 : vector<8x32xf32>
    %44 = arith.truncf %43 : vector<8x32xf32> to vector<8x32xbf16>
    %45 = vector.extract_strided_slice %40 {offsets = [0, 32], sizes = [8, 32], strides = [1, 1]} : vector<8x96xf32> to vector<8x32xf32>
    %46 = vector.broadcast %7 : vector<1x32xf32> to vector<8x32xf32>
    %47 = arith.addf %45, %46 : vector<8x32xf32>
    %48 = arith.truncf %47 : vector<8x32xf32> to vector<8x32xbf16>
    %49 = vector.extract_strided_slice %40 {offsets = [0, 64], sizes = [8, 32], strides = [1, 1]} : vector<8x96xf32> to vector<8x32xf32>
    %50 = vector.broadcast %8 : vector<1x32xf32> to vector<8x32xf32>
    %51 = arith.addf %49, %50 : vector<8x32xf32>
    %52 = arith.truncf %51 : vector<8x32xf32> to vector<8x32xbf16>
    %53 = vector.extract_strided_slice %44 {offsets = [0, 0], sizes = [8, 8], strides = [1, 1]} : vector<8x32xbf16> to vector<8x8xbf16>
    %54 = vector.extract_strided_slice %44 {offsets = [0, 8], sizes = [8, 8], strides = [1, 1]} : vector<8x32xbf16> to vector<8x8xbf16>
    %55 = vector.extract_strided_slice %44 {offsets = [0, 16], sizes = [8, 8], strides = [1, 1]} : vector<8x32xbf16> to vector<8x8xbf16>
    %56 = vector.extract_strided_slice %44 {offsets = [0, 24], sizes = [8, 8], strides = [1, 1]} : vector<8x32xbf16> to vector<8x8xbf16>
    %57 = vector.shape_cast %53 : vector<8x8xbf16> to vector<1x8x8xbf16>
    %58 = vector.shape_cast %54 : vector<8x8xbf16> to vector<1x8x8xbf16>
    %59 = vector.shape_cast %55 : vector<8x8xbf16> to vector<1x8x8xbf16>
    %60 = vector.shape_cast %56 : vector<8x8xbf16> to vector<1x8x8xbf16>
    %61 = tpu.concatenate %57, %58, %59, %60 in 0 : vector<1x8x8xbf16>, vector<1x8x8xbf16>, vector<1x8x8xbf16>, vector<1x8x8xbf16> -> vector<4x8x8xbf16>
    %62 = vector.extract_strided_slice %48 {offsets = [0, 0], sizes = [8, 8], strides = [1, 1]} : vector<8x32xbf16> to vector<8x8xbf16>
    %63 = vector.extract_strided_slice %48 {offsets = [0, 8], sizes = [8, 8], strides = [1, 1]} : vector<8x32xbf16> to vector<8x8xbf16>
    %64 = vector.extract_strided_slice %48 {offsets = [0, 16], sizes = [8, 8], strides = [1, 1]} : vector<8x32xbf16> to vector<8x8xbf16>
    %65 = vector.extract_strided_slice %48 {offsets = [0, 24], sizes = [8, 8], strides = [1, 1]} : vector<8x32xbf16> to vector<8x8xbf16>
    %66 = vector.shape_cast %62 : vector<8x8xbf16> to vector<1x8x8xbf16>
    %67 = vector.shape_cast %63 : vector<8x8xbf16> to vector<1x8x8xbf16>
    %68 = vector.shape_cast %64 : vector<8x8xbf16> to vector<1x8x8xbf16>
    %69 = vector.shape_cast %65 : vector<8x8xbf16> to vector<1x8x8xbf16>
    %70 = tpu.concatenate %66, %67, %68, %69 in 0 : vector<1x8x8xbf16>, vector<1x8x8xbf16>, vector<1x8x8xbf16>, vector<1x8x8xbf16> -> vector<4x8x8xbf16>
    %71 = vector.extract_strided_slice %52 {offsets = [0, 0], sizes = [8, 8], strides = [1, 1]} : vector<8x32xbf16> to vector<8x8xbf16>
    %72 = vector.extract_strided_slice %52 {offsets = [0, 8], sizes = [8, 8], strides = [1, 1]} : vector<8x32xbf16> to vector<8x8xbf16>
    %73 = vector.extract_strided_slice %52 {offsets = [0, 16], sizes = [8, 8], strides = [1, 1]} : vector<8x32xbf16> to vector<8x8xbf16>
    %74 = vector.extract_strided_slice %52 {offsets = [0, 24], sizes = [8, 8], strides = [1, 1]} : vector<8x32xbf16> to vector<8x8xbf16>
    %75 = vector.shape_cast %71 : vector<8x8xbf16> to vector<1x8x8xbf16>
    %76 = vector.shape_cast %72 : vector<8x8xbf16> to vector<1x8x8xbf16>
    %77 = vector.shape_cast %73 : vector<8x8xbf16> to vector<1x8x8xbf16>
    %78 = vector.shape_cast %74 : vector<8x8xbf16> to vector<1x8x8xbf16>
    %79 = tpu.concatenate %75, %76, %77, %78 in 0 : vector<1x8x8xbf16>, vector<1x8x8xbf16>, vector<1x8x8xbf16>, vector<1x8x8xbf16> -> vector<4x8x8xbf16>
    "tpu.trace_start"() <{level = 10 : i32, message = "hqd,hkd->hqk"}> : () -> ()
    %cst_13 = arith.constant dense<0.000000e+00> : vector<4x8x8xf32>
    %80 = tpu.matmul %61, %70, %cst_13 {dimension_numbers = #tpu.dot_dimension_numbers<[2], [2], [1], [1], [0, 0, 0, 1, 1, 1], [0], [0]>} : vector<4x8x8xbf16>, vector<4x8x8xbf16>, vector<4x8x8xf32> -> vector<4x8x8xf32>
    "tpu.trace_stop"() : () -> ()
    %cst_14 = arith.constant 0.353553385 : f32
    %81 = vector.broadcast %cst_14 : f32 to vector<4x8x8xf32>
    %82 = arith.mulf %80, %81 : vector<4x8x8xf32>
    %cst_15 = arith.constant dense<0xFF800000> : vector<4x8xf32>
    %83 = vector.multi_reduction <maximumf>, %82, %cst_15 [2] : vector<4x8x8xf32> to vector<4x8xf32>
    %84 = vector.shape_cast %83 : vector<4x8xf32> to vector<4x8x1xf32>
    %85 = vector.broadcast %84 : vector<4x8x1xf32> to vector<4x8x8xf32>
    %86 = arith.subf %82, %85 : vector<4x8x8xf32>
    %87 = math.exp %86 : vector<4x8x8xf32>
    %cst_16 = arith.constant dense<0.000000e+00> : vector<4x8xf32>
    %88 = vector.multi_reduction <add>, %87, %cst_16 [2] : vector<4x8x8xf32> to vector<4x8xf32>
    %89 = vector.shape_cast %88 : vector<4x8xf32> to vector<4x8x1xf32>
    %90 = vector.broadcast %89 : vector<4x8x1xf32> to vector<4x8x8xf32>
    %91 = arith.divf %87, %90 : vector<4x8x8xf32>
    %c0_17 = arith.constant 0 : index
    %c0_18 = arith.constant 0 : index
    %c0_19 = arith.constant 0 : index
    %c0_20 = arith.constant 0 : index
    %c0_21 = arith.constant 0 : index
    %92 = vector.load %arg10[%c0_17, %c0_18, %c0_19, %c0_20, %c0_21] : memref<1x1x4x8x8xf32, #tpu.memory_space<vmem>>, vector<1x1x4x8x8xf32>
    %93 = vector.shape_cast %92 : vector<1x1x4x8x8xf32> to vector<4x8x8xf32>
    %94 = vector.shape_cast %91 : vector<4x8x8xf32> to vector<1x1x4x8x8xf32>
    tpu.vector_store %arg10[%c0_17, %c0_18, %c0_19, %c0_20, %c0_21], %94 {strides = array<i32>} : memref<1x1x4x8x8xf32, #tpu.memory_space<vmem>>, vector<1x1x4x8x8xf32>,
    %95 = arith.truncf %91 : vector<4x8x8xf32> to vector<4x8x8xbf16>
    "tpu.trace_start"() <{level = 10 : i32, message = "hqk,hkd->hqd"}> : () -> ()
    %cst_22 = arith.constant dense<0.000000e+00> : vector<4x8x8xf32>
    %96 = tpu.matmul %95, %79, %cst_22 {dimension_numbers = #tpu.dot_dimension_numbers<[2], [1], [1], [2], [0, 0, 0, 1, 1, 2], [0], [0]>} : vector<4x8x8xbf16>, vector<4x8x8xbf16>, vector<4x8x8xf32> -> vector<4x8x8xf32>
    "tpu.trace_stop"() : () -> ()
    %97 = vector.extract_strided_slice %96 {offsets = [0, 0, 0], sizes = [1, 8, 8], strides = [1, 1, 1]} : vector<4x8x8xf32> to vector<1x8x8xf32>
    %98 = vector.shape_cast %97 : vector<1x8x8xf32> to vector<8x8xf32>
    %99 = arith.truncf %98 : vector<8x8xf32> to vector<8x8xbf16>
    %c0_23 = arith.constant 0 : index
    %c0_24 = arith.constant 0 : index
    %100 = vector.load %arg12[%c0_23, %c0_24] : memref<8x32xbf16, #tpu.memory_space<vmem>>, vector<8x8xbf16>
    tpu.vector_store %arg12[%c0_23, %c0_24], %99 {strides = array<i32>} : memref<8x32xbf16, #tpu.memory_space<vmem>>, vector<8x8xbf16>,
    %101 = vector.extract_strided_slice %96 {offsets = [1, 0, 0], sizes = [1, 8, 8], strides = [1, 1, 1]} : vector<4x8x8xf32> to vector<1x8x8xf32>
    %102 = vector.shape_cast %101 : vector<1x8x8xf32> to vector<8x8xf32>
    %103 = arith.truncf %102 : vector<8x8xf32> to vector<8x8xbf16>
    %c0_25 = arith.constant 0 : index
    %c8 = arith.constant 8 : index
    %104 = vector.load %arg12[%c0_25, %c8] : memref<8x32xbf16, #tpu.memory_space<vmem>>, vector<8x8xbf16>
    tpu.vector_store %arg12[%c0_25, %c8], %103 {strides = array<i32>} : memref<8x32xbf16, #tpu.memory_space<vmem>>, vector<8x8xbf16>,
    %105 = vector.extract_strided_slice %96 {offsets = [2, 0, 0], sizes = [1, 8, 8], strides = [1, 1, 1]} : vector<4x8x8xf32> to vector<1x8x8xf32>
    %106 = vector.shape_cast %105 : vector<1x8x8xf32> to vector<8x8xf32>
    %107 = arith.truncf %106 : vector<8x8xf32> to vector<8x8xbf16>
    %c0_26 = arith.constant 0 : index
    %c16 = arith.constant 16 : index
    %108 = vector.load %arg12[%c0_26, %c16] : memref<8x32xbf16, #tpu.memory_space<vmem>>, vector<8x8xbf16>
    tpu.vector_store %arg12[%c0_26, %c16], %107 {strides = array<i32>} : memref<8x32xbf16, #tpu.memory_space<vmem>>, vector<8x8xbf16>,
    %109 = vector.extract_strided_slice %96 {offsets = [3, 0, 0], sizes = [1, 8, 8], strides = [1, 1, 1]} : vector<4x8x8xf32> to vector<1x8x8xf32>
    %110 = vector.shape_cast %109 : vector<1x8x8xf32> to vector<8x8xf32>
    %111 = arith.truncf %110 : vector<8x8xf32> to vector<8x8xbf16>
    %c0_27 = arith.constant 0 : index
    %c24 = arith.constant 24 : index
    %112 = vector.load %arg12[%c0_27, %c24] : memref<8x32xbf16, #tpu.memory_space<vmem>>, vector<8x8xbf16>
    tpu.vector_store %arg12[%c0_27, %c24], %111 {strides = array<i32>} : memref<8x32xbf16, #tpu.memory_space<vmem>>, vector<8x8xbf16>,
    %c0_28 = arith.constant 0 : index
    %c0_29 = arith.constant 0 : index
    %113 = vector.load %arg12[%c0_28, %c0_29] : memref<8x32xbf16, #tpu.memory_space<vmem>>, vector<8x32xbf16>
    %c0_30 = arith.constant 0 : index
    %c0_31 = arith.constant 0 : index
    %c0_32 = arith.constant 0 : index
    %114 = vector.load %arg4[%c0_30, %c0_31, %c0_32] : memref<1x32x32xbf16, #tpu.memory_space<vmem>>, vector<1x32x32xbf16>
    %115 = vector.shape_cast %114 : vector<1x32x32xbf16> to vector<32x32xbf16>
    %cst_33 = arith.constant dense<0.000000e+00> : vector<8x32xf32>
    %116 = tpu.matmul %113, %115, %cst_33 {dimension_numbers = #tpu.dot_dimension_numbers<[1], [0], [0], [1], [0, 0, 1, 1], [], []>} : vector<8x32xbf16>, vector<32x32xbf16>, vector<8x32xf32> -> vector<8x32xf32>
    %117 = vector.broadcast %9 : vector<1x32xf32> to vector<8x32xf32>
    %118 = arith.addf %116, %117 : vector<8x32xf32>
    %119 = arith.addf %3, %118 : vector<8x32xf32>
    %cst_34 = arith.constant dense<0.000000e+00> : vector<8xf32>
    %120 = vector.multi_reduction <add>, %119, %cst_34 [1] : vector<8x32xf32> to vector<8xf32>
    %121 = vector.shape_cast %120 : vector<8xf32> to vector<8x1xf32>
    %cst_35 = arith.constant 3.200000e+01 : f32
    %122 = vector.broadcast %cst_35 : f32 to vector<8x1xf32>
    %123 = arith.divf %121, %122 : vector<8x1xf32>
    %124 = vector.broadcast %123 : vector<8x1xf32> to vector<8x32xf32>
    %125 = arith.subf %119, %124 : vector<8x32xf32>
    %126 = arith.mulf %125, %125 : vector<8x32xf32>
    %cst_36 = arith.constant dense<0.000000e+00> : vector<8xf32>
    %127 = vector.multi_reduction <add>, %126, %cst_36 [1] : vector<8x32xf32> to vector<8xf32>
    %128 = vector.shape_cast %127 : vector<8xf32> to vector<8x1xf32>
    %cst_37 = arith.constant 3.200000e+01 : f32
    %129 = vector.broadcast %cst_37 : f32 to vector<8x1xf32>
    %130 = arith.divf %128, %129 : vector<8x1xf32>
    %131 = vector.broadcast %123 : vector<8x1xf32> to vector<8x32xf32>
    %132 = arith.subf %119, %131 : vector<8x32xf32>
    %cst_38 = arith.constant 9.99999974E-6 : f32
    %133 = vector.broadcast %cst_38 : f32 to vector<8x1xf32>
    %134 = arith.addf %130, %133 : vector<8x1xf32>
    %135 = math.rsqrt %134 : vector<8x1xf32>
    %136 = vector.broadcast %135 : vector<8x1xf32> to vector<8x32xf32>
    %137 = arith.mulf %132, %136 : vector<8x32xf32>
    %138 = vector.broadcast %12 : vector<1x32xf32> to vector<8x32xf32>
    %139 = arith.mulf %137, %138 : vector<8x32xf32>
    %140 = vector.broadcast %13 : vector<1x32xf32> to vector<8x32xf32>
    %141 = arith.addf %139, %140 : vector<8x32xf32>
    %142 = arith.truncf %141 : vector<8x32xf32> to vector<8x32xbf16>
    %c0_39 = arith.constant 0 : index
    %c0_40 = arith.constant 0 : index
    %c0_41 = arith.constant 0 : index
    %143 = vector.load %arg5[%c0_39, %c0_40, %c0_41] : memref<1x32x64xbf16, #tpu.memory_space<vmem>>, vector<1x32x64xbf16>
    %144 = vector.shape_cast %143 : vector<1x32x64xbf16> to vector<32x64xbf16>
    %cst_42 = arith.constant dense<0.000000e+00> : vector<8x64xf32>
    %145 = tpu.matmul %142, %144, %cst_42 {dimension_numbers = #tpu.dot_dimension_numbers<[1], [0], [0], [1], [0, 0, 1, 1], [], []>} : vector<8x32xbf16>, vector<32x64xbf16>, vector<8x64xf32> -> vector<8x64xf32>
    %c0_43 = arith.constant 0 : index
    %c0_44 = arith.constant 0 : index
    %c0_45 = arith.constant 0 : index
    %146 = vector.load %arg8[%c0_43, %c0_44, %c0_45] : memref<1x1x64xf32, #tpu.memory_space<vmem>>, vector<1x1x64xf32>
    %147 = vector.shape_cast %146 : vector<1x1x64xf32> to vector<1x64xf32>
    %148 = vector.broadcast %147 : vector<1x64xf32> to vector<8x64xf32>
    %149 = arith.addf %145, %148 : vector<8x64xf32>
    %cst_46 = arith.constant 5.000000e-01 : f32
    %150 = vector.broadcast %cst_46 : f32 to vector<8x64xf32>
    %151 = arith.mulf %150, %149 : vector<8x64xf32>
    %cst_47 = arith.constant 0.707106769 : f32
    %152 = vector.broadcast %cst_47 : f32 to vector<8x64xf32>
    %153 = arith.mulf %149, %152 : vector<8x64xf32>
    %154 = math.erf %153 : vector<8x64xf32>
    %cst_48 = arith.constant 1.000000e+00 : f32
    %155 = vector.broadcast %cst_48 : f32 to vector<8x64xf32>
    %156 = arith.addf %155, %154 : vector<8x64xf32>
    %157 = arith.mulf %151, %156 : vector<8x64xf32>
    %158 = arith.truncf %157 : vector<8x64xf32> to vector<8x64xbf16>
    %c0_49 = arith.constant 0 : index
    %c0_50 = arith.constant 0 : index
    %c0_51 = arith.constant 0 : index
    %159 = vector.load %arg6[%c0_49, %c0_50, %c0_51] : memref<1x64x32xbf16, #tpu.memory_space<vmem>>, vector<1x64x32xbf16>
    %160 = vector.shape_cast %159 : vector<1x64x32xbf16> to vector<64x32xbf16>
    %cst_52 = arith.constant dense<0.000000e+00> : vector<8x32xf32>
    %161 = tpu.matmul %158, %160, %cst_52 {dimension_numbers = #tpu.dot_dimension_numbers<[1], [0], [0], [1], [0, 0, 1, 1], [], []>} : vector<8x64xbf16>, vector<64x32xbf16>, vector<8x32xf32> -> vector<8x32xf32>
    %162 = vector.broadcast %14 : vector<1x32xf32> to vector<8x32xf32>
    %163 = arith.addf %161, %162 : vector<8x32xf32>
    %164 = arith.addf %119, %163 : vector<8x32xf32>
    %c0_53 = arith.constant 0 : index
    %c0_54 = arith.constant 0 : index
    %165 = vector.load %arg11[%c0_53, %c0_54] : memref<8x32xf32, #tpu.memory_space<vmem>>, vector<8x32xf32>
    tpu.vector_store %arg11[%c0_53, %c0_54], %164 {strides = array<i32>} : memref<8x32xf32, #tpu.memory_space<vmem>>, vector<8x32xf32>,
    %c1_i32 = arith.constant 1 : i32
    %166 = arith.cmpi eq, %arg1, %c1_i32 : i32
    %167 = arith.extui %166 : i1 to i32
    %c0_i32_55 = arith.constant 0 : i32
    %168 = arith.cmpi ne, %167, %c0_i32_55 : i32
    scf.if %168 {
      %c0_56 = arith.constant 0 : index
      %c0_57 = arith.constant 0 : index
      %c0_58 = arith.constant 0 : index
      %169 = vector.load %arg9[%c0_56, %c0_57, %c0_58] : memref<1x8x32xf32, #tpu.memory_space<vmem>>, vector<1x8x32xf32>
      %170 = vector.shape_cast %169 : vector<1x8x32xf32> to vector<8x32xf32>
      %171 = vector.shape_cast %164 : vector<8x32xf32> to vector<1x8x32xf32>
      tpu.vector_store %arg9[%c0_56, %c0_57, %c0_58], %171 {strides = array<i32>} : memref<1x8x32xf32, #tpu.memory_space<vmem>>, vector<1x8x32xf32>,
    } else {
    }
    return
  }
  func.func @transform_0(%arg0: i32, %arg1: i32) -> (i32, i32, i32) {
    %c0_i32 = arith.constant 0 : i32
    %c0_i32_0 = arith.constant 0 : i32
    %c0_i32_1 = arith.constant 0 : i32
    return %arg0, %c0_i32, %c0_i32_0 : i32, i32, i32
  }
  func.func @transform_1(%arg0: i32, %arg1: i32) -> (i32, i32, i32) {
    %c0_i32 = arith.constant 0 : i32
    %c0_i32_0 = arith.constant 0 : i32
    %c0_i32_1 = arith.constant 0 : i32
    return %arg1, %c0_i32, %c0_i32_0 : i32, i32, i32
  }
  func.func @transform_2(%arg0: i32, %arg1: i32) -> (i32, i32, i32) {
    %c0_i32 = arith.constant 0 : i32
    %c0_i32_0 = arith.constant 0 : i32
    %c0_i32_1 = arith.constant 0 : i32
    return %arg1, %c0_i32, %c0_i32_0 : i32, i32, i32
  }
  func.func @transform_3(%arg0: i32, %arg1: i32) -> (i32, i32, i32) {
    %c0_i32 = arith.constant 0 : i32
    %c0_i32_0 = arith.constant 0 : i32
    %c0_i32_1 = arith.constant 0 : i32
    return %arg1, %c0_i32, %c0_i32_0 : i32, i32, i32
  }
  func.func @transform_4(%arg0: i32, %arg1: i32) -> (i32, i32, i32) {
    %c0_i32 = arith.constant 0 : i32
    %c0_i32_0 = arith.constant 0 : i32
    %c0_i32_1 = arith.constant 0 : i32
    return %arg1, %c0_i32, %c0_i32_0 : i32, i32, i32
  }
  func.func @transform_5(%arg0: i32, %arg1: i32) -> (i32, i32, i32) {
    %c0_i32 = arith.constant 0 : i32
    %c0_i32_0 = arith.constant 0 : i32
    %c0_i32_1 = arith.constant 0 : i32
    return %arg1, %c0_i32, %c0_i32_0 : i32, i32, i32
  }
  func.func @transform_6(%arg0: i32, %arg1: i32) -> (i32, i32, i32) {
    %c0_i32 = arith.constant 0 : i32
    %c0_i32_0 = arith.constant 0 : i32
    %c0_i32_1 = arith.constant 0 : i32
    return %arg1, %c0_i32, %c0_i32_0 : i32, i32, i32
  }
  func.func @transform_7(%arg0: i32, %arg1: i32) -> (i32, i32, i32) {
    %c0_i32 = arith.constant 0 : i32
    %c0_i32_0 = arith.constant 0 : i32
    %c0_i32_1 = arith.constant 0 : i32
    return %arg0, %c0_i32, %c0_i32_0 : i32, i32, i32
  }
  func.func @transform_8(%arg0: i32, %arg1: i32) -> (i32, i32, i32, i32, i32) {
    %c0_i32 = arith.constant 0 : i32
    %c0_i32_0 = arith.constant 0 : i32
    %c0_i32_1 = arith.constant 0 : i32
    %c0_i32_2 = arith.constant 0 : i32
    return %arg1, %arg0, %c0_i32, %c0_i32_0, %c0_i32_1 : i32, i32, i32, i32, i32
  }
}

</mosaic_0001>

<llo_original>
// kernel: tpu_custom_call.1
$region0: #{tpu_custom_call.1}
  #allocation0 [shape = 'u32[]', space=smem, size = 0x4, offset = 0x4, fixed_abs, tag = 'smem constant byte address 0x4 - core index']
  #allocation1 [shape = 'u32[72,128]{1,0:T(1,128)}', space=vmem, size = 0x9000, scoped, tag = 'internal scratch']
  #allocation2 [shape = 'f32[8,32]{1,0:T(8,128)}', space=vmem, size = 0x1000, scoped, tag = 'scratch operand']
  #allocation3 [shape = 'bf16[8,32]{1,0:T(8,128)(2,1)}', space=vmem, size = 0x800, scoped, tag = 'scratch operand']
  %s0 = inlined_call_operand.vmem [shape: f32[2,8,32], index: 0, kind: input, shape index: {}]
  %s1 = inlined_call_operand.vmem [shape: bf16[2,32,96], index: 1, kind: input, shape index: {}]
  %s2 = inlined_call_operand.vmem [shape: bf16[2,32,32], index: 2, kind: input, shape index: {}]
  %s3 = inlined_call_operand.vmem [shape: bf16[2,32,64], index: 3, kind: input, shape index: {}]
  %s4 = inlined_call_operand.vmem [shape: bf16[2,64,32], index: 4, kind: input, shape index: {}]
  %s5 = inlined_call_operand.vmem [shape: f32[2,9,32], index: 5, kind: input, shape index: {}]
  %s6 = inlined_call_operand.vmem [shape: f32[2,1,64], index: 6, kind: input, shape index: {}]
  %s7 = inlined_call_operand.hbm [shape: f32[2,8,32], index: 7, kind: output, shape index: {0}]
  %s8 = inlined_call_operand.hbm [shape: f32[2,2,4,8,8], index: 8, kind: output, shape index: {1}]
  %9 = xla_tuple %s7, %s8
  %s10 = sld [smem:[#allocation0]]
  $region77: #{tpu_custom_call.1} parent=0
    _
  %s12 = ssub.s32 1, %s10
  %s13 = scalar_select 0, %s12, %s10
  $region1: #{tpu_custom_call.1} parent=0
    #allocation4 [shape = 'u8[8192]{0}', space=vmem, size = 0x2000, scoped, tag = 'output window, operand 0']
    #allocation5 [shape = 's32[2]{0}', space=sflag, size = 0x8, scoped, tag = 'scoped memory for tpu_custom_call.1']
    #allocation6 [shape = 'u8[32768]{0}', space=vmem, size = 0x8000, scoped, tag = 'output window, operand 1']
    #allocation7 [shape = 's32[2]{0}', space=sflag, size = 0x8, scoped, tag = 'scoped memory for tpu_custom_call.1']
    %14 = vsyncpa [#allocation5], 0
    %s15 = scalar_lea.sflag [#allocation5], 1
    %16 = vsyncpa %s15, 0
    %17 = vsyncpa [#allocation7], 0
    %s18 = scalar_lea.sflag [#allocation7], 1
    %19 = vsyncpa %s18, 0
    loop: start=0, step=1, limit=6
    $region2: #{tpu_custom_call.1} parent=1 // loop_pre_header
      _
    $region3: #{tpu_custom_call.1} parent=1 // loop_header
      %s21 = sphi 0, %s25
      %p22 = scmp.ge.s32.totalorder %s21, 6
      %s28 = sphi 0, %s40
      %s29 = sphi 0, %s36
      %s30 = sphi 0, %s28
      %s31 = sphi 0, %s29
      %s32 = sphi 0, %s30
      %s33 = sphi 0, %s31
      %s43 = sphi 0, %s45
      %s46 = sphi 0, %s43
      %s47 = sphi 0, %s46
      %s63 = sphi 0, %s47
      %s69 = sphi 0, %s71
      %s72 = sphi 0, %s69
      %s73 = sphi 0, %s72
      %s89 = sphi 0, %s73
      %s95 = sphi 0, %s97
      %s98 = sphi 0, %s95
      %s99 = sphi 0, %s98
      %s115 = sphi 0, %s99
      %s121 = sphi 0, %s123
      %s124 = sphi 0, %s121
      %s125 = sphi 0, %s124
      %s141 = sphi 0, %s125
      %s147 = sphi 0, %s149
      %s150 = sphi 0, %s147
      %s151 = sphi 0, %s150
      %s167 = sphi 0, %s151
      %s173 = sphi 0, %s175
      %s176 = sphi 0, %s173
      %s177 = sphi 0, %s176
      %s193 = sphi 0, %s177
      %s199 = sphi 0, %s201
      %s202 = sphi 0, %s199
      %s203 = sphi 0, %s202
      %s219 = sphi 0, %s203
      %s225 = sphi 0, %s227
      %s228 = sphi 0, %s225
      %s229 = sphi 0, %s228
      %s245 = sphi 0, %s229
      %s253 = sphi 0, %s255
      %s256 = sphi 0, %s253
      %s257 = sphi 0, %s256
      %s273 = sphi 0, %s257
    $region4: #{tpu_custom_call.1} parent=1 // loop_header_branch
      %24 = sbr.rel (%p22) target = $region8
    $region5: #{tpu_custom_call.1} parent=1 // loop_body
      %s26 = ssub.s32 %s21, 1
      %s27 = ssub.s32 %s21, 2
      %s34 = sadd.s32 1, %s29
      %p35 = scmp.ge.s32.totalorder %s34, 2
      %s36 = scalar_select %p35, 0, %s34
      %s37 = sadd.s32 1, %s28
      %s38 = scalar_select %p35, %s37, %s28
      %p39 = scmp.ge.s32.totalorder %s38, 2
      %s40 = scalar_select %p39, 0, %s38
      %s41 = ssub.s32 %s28, %s40
      %p42 = scmp.eq.s32.totalorder %s41, 0
      %s44 = sadd.s32 %s43, 1
      %s45 = scalar_select %p42, %s43, %s44
      %p48 = pneg %p42
      %p49 = scmp.eq.s32.totalorder %s21, 3
      %p50 = por %p48, %p49
      %p51 = scmp.ne.s32.totalorder %s43, %s46
      %p52 = scmp.eq.s32.totalorder %s21, 0
      %p53 = por %p51, %p52
      %p54 = scmp.ne.s32.totalorder %s43, %s46
      %p55 = scmp.eq.s32.totalorder %s26, 3
      %p56 = por %p54, %p55
      %p57 = scmp.ne.s32.totalorder %s46, %s47
      %p58 = scmp.eq.s32.totalorder %s26, 0
      %p59 = por %p57, %p58
      %p60 = scmp.ne.s32.totalorder %s46, %s47
      %p61 = scmp.eq.s32.totalorder %s27, 3
      %p62 = por %p60, %p61
      %p64 = scmp.ne.s32.totalorder %s47, %s63
      %p65 = scmp.eq.s32.totalorder %s27, 0
      %p66 = por %p64, %p65
      %s67 = ssub.s32 %s29, %s36
      %p68 = scmp.eq.s32.totalorder %s67, 0
      %s70 = sadd.s32 %s69, 1
      %s71 = scalar_select %p68, %s69, %s70
      %p74 = pneg %p68
      %p75 = scmp.eq.s32.totalorder %s21, 3
      %p76 = por %p74, %p75
      %p77 = scmp.ne.s32.totalorder %s69, %s72
      %p78 = scmp.eq.s32.totalorder %s21, 0
      %p79 = por %p77, %p78
      %p80 = scmp.ne.s32.totalorder %s69, %s72
      %p81 = scmp.eq.s32.totalorder %s26, 3
      %p82 = por %p80, %p81
      %p83 = scmp.ne.s32.totalorder %s72, %s73
      %p84 = scmp.eq.s32.totalorder %s26, 0
      %p85 = por %p83, %p84
      %p86 = scmp.ne.s32.totalorder %s72, %s73
      %p87 = scmp.eq.s32.totalorder %s27, 3
      %p88 = por %p86, %p87
      %p90 = scmp.ne.s32.totalorder %s73, %s89
      %p91 = scmp.eq.s32.totalorder %s27, 0
      %p92 = por %p90, %p91
      %s93 = ssub.s32 %s29, %s36
      %p94 = scmp.eq.s32.totalorder %s93, 0
      %s96 = sadd.s32 %s95, 1
      %s97 = scalar_select %p94, %s95, %s96
      %p100 = pneg %p94
      %p101 = scmp.eq.s32.totalorder %s21, 3
      %p102 = por %p100, %p101
      %p103 = scmp.ne.s32.totalorder %s95, %s98
      %p104 = scmp.eq.s32.totalorder %s21, 0
      %p105 = por %p103, %p104
      %p106 = scmp.ne.s32.totalorder %s95, %s98
      %p107 = scmp.eq.s32.totalorder %s26, 3
      %p108 = por %p106, %p107
      %p109 = scmp.ne.s32.totalorder %s98, %s99
      %p110 = scmp.eq.s32.totalorder %s26, 0
      %p111 = por %p109, %p110
      %p112 = scmp.ne.s32.totalorder %s98, %s99
      %p113 = scmp.eq.s32.totalorder %s27, 3
      %p114 = por %p112, %p113
      %p116 = scmp.ne.s32.totalorder %s99, %s115
      %p117 = scmp.eq.s32.totalorder %s27, 0
      %p118 = por %p116, %p117
      %s119 = ssub.s32 %s29, %s36
      %p120 = scmp.eq.s32.totalorder %s119, 0
      %s122 = sadd.s32 %s121, 1
      %s123 = scalar_select %p120, %s121, %s122
      %p126 = pneg %p120
      %p127 = scmp.eq.s32.totalorder %s21, 3
      %p128 = por %p126, %p127
      %p129 = scmp.ne.s32.totalorder %s121, %s124
      %p130 = scmp.eq.s32.totalorder %s21, 0
      %p131 = por %p129, %p130
      %p132 = scmp.ne.s32.totalorder %s121, %s124
      %p133 = scmp.eq.s32.totalorder %s26, 3
      %p134 = por %p132, %p133
      %p135 = scmp.ne.s32.totalorder %s124, %s125
      %p136 = scmp.eq.s32.totalorder %s26, 0
      %p137 = por %p135, %p136
      %p138 = scmp.ne.s32.totalorder %s124, %s125
      %p139 = scmp.eq.s32.totalorder %s27, 3
      %p140 = por %p138, %p139
      %p142 = scmp.ne.s32.totalorder %s125, %s141
      %p143 = scmp.eq.s32.totalorder %s27, 0
      %p144 = por %p142, %p143
      %s145 = ssub.s32 %s29, %s36
      %p146 = scmp.eq.s32.totalorder %s145, 0
      %s148 = sadd.s32 %s147, 1
      %s149 = scalar_select %p146, %s147, %s148
      %p152 = pneg %p146
      %p153 = scmp.eq.s32.totalorder %s21, 3
      %p154 = por %p152, %p153
      %p155 = scmp.ne.s32.totalorder %s147, %s150
      %p156 = scmp.eq.s32.totalorder %s21, 0
      %p157 = por %p155, %p156
      %p158 = scmp.ne.s32.totalorder %s147, %s150
      %p159 = scmp.eq.s32.totalorder %s26, 3
      %p160 = por %p158, %p159
      %p161 = scmp.ne.s32.totalorder %s150, %s151
      %p162 = scmp.eq.s32.totalorder %s26, 0
      %p163 = por %p161, %p162
      %p164 = scmp.ne.s32.totalorder %s150, %s151
      %p165 = scmp.eq.s32.totalorder %s27, 3
      %p166 = por %p164, %p165
      %p168 = scmp.ne.s32.totalorder %s151, %s167
      %p169 = scmp.eq.s32.totalorder %s27, 0
      %p170 = por %p168, %p169
      %s171 = ssub.s32 %s29, %s36
      %p172 = scmp.eq.s32.totalorder %s171, 0
      %s174 = sadd.s32 %s173, 1
      %s175 = scalar_select %p172, %s173, %s174
      %p178 = pneg %p172
      %p179 = scmp.eq.s32.totalorder %s21, 3
      %p180 = por %p178, %p179
      %p181 = scmp.ne.s32.totalorder %s173, %s176
      %p182 = scmp.eq.s32.totalorder %s21, 0
      %p183 = por %p181, %p182
      %p184 = scmp.ne.s32.totalorder %s173, %s176
      %p185 = scmp.eq.s32.totalorder %s26, 3
      %p186 = por %p184, %p185
      %p187 = scmp.ne.s32.totalorder %s176, %s177
      %p188 = scmp.eq.s32.totalorder %s26, 0
      %p189 = por %p187, %p188
      %p190 = scmp.ne.s32.totalorder %s176, %s177
      %p191 = scmp.eq.s32.totalorder %s27, 3
      %p192 = por %p190, %p191
      %p194 = scmp.ne.s32.totalorder %s177, %s193
      %p195 = scmp.eq.s32.totalorder %s27, 0
      %p196 = por %p194, %p195
      %s197 = ssub.s32 %s29, %s36
      %p198 = scmp.eq.s32.totalorder %s197, 0
      %s200 = sadd.s32 %s199, 1
      %s201 = scalar_select %p198, %s199, %s200
      %p204 = pneg %p198
      %p205 = scmp.eq.s32.totalorder %s21, 3
      %p206 = por %p204, %p205
      %p207 = scmp.ne.s32.totalorder %s199, %s202
      %p208 = scmp.eq.s32.totalorder %s21, 0
      %p209 = por %p207, %p208
      %p210 = scmp.ne.s32.totalorder %s199, %s202
      %p211 = scmp.eq.s32.totalorder %s26, 3
      %p212 = por %p210, %p211
      %p213 = scmp.ne.s32.totalorder %s202, %s203
      %p214 = scmp.eq.s32.totalorder %s26, 0
      %p215 = por %p213, %p214
      %p216 = scmp.ne.s32.totalorder %s202, %s203
      %p217 = scmp.eq.s32.totalorder %s27, 3
      %p218 = por %p216, %p217
      %p220 = scmp.ne.s32.totalorder %s203, %s219
      %p221 = scmp.eq.s32.totalorder %s27, 0
      %p222 = por %p220, %p221
      %s223 = ssub.s32 %s28, %s40
      %p224 = scmp.eq.s32.totalorder %s223, 0
      %s226 = sadd.s32 %s225, 1
      %s227 = scalar_select %p224, %s225, %s226
      %p230 = pneg %p224
      %p231 = scmp.eq.s32.totalorder %s21, 3
      %p232 = por %p230, %p231
      %p233 = scmp.ne.s32.totalorder %s225, %s228
      %p234 = scmp.eq.s32.totalorder %s21, 0
      %p235 = por %p233, %p234
      %p236 = scmp.ne.s32.totalorder %s225, %s228
      %p237 = scmp.eq.s32.totalorder %s26, 3
      %p238 = por %p236, %p237
      %p239 = scmp.ne.s32.totalorder %s228, %s229
      %p240 = scmp.eq.s32.totalorder %s26, 0
      %p241 = por %p239, %p240
      %p242 = scmp.ne.s32.totalorder %s228, %s229
      %p243 = scmp.eq.s32.totalorder %s27, 3
      %p244 = por %p242, %p243
      %p246 = scmp.ne.s32.totalorder %s229, %s245
      %p247 = scmp.eq.s32.totalorder %s27, 0
      %p248 = por %p246, %p247
      %s249 = ssub.s32 %s29, %s36
      %s250 = ssub.s32 %s28, %s40
      %s251 = sor.u32 %s249, %s250
      %p252 = scmp.eq.s32.totalorder %s251, 0
      %s254 = sadd.s32 %s253, 1
      %s255 = scalar_select %p252, %s253, %s254
      %p258 = pneg %p252
      %p259 = scmp.eq.s32.totalorder %s21, 3
      %p260 = por %p258, %p259
      %p261 = scmp.ne.s32.totalorder %s253, %s256
      %p262 = scmp.eq.s32.totalorder %s21, 0
      %p263 = por %p261, %p262
      %p264 = scmp.ne.s32.totalorder %s253, %s256
      %p265 = scmp.eq.s32.totalorder %s26, 3
      %p266 = por %p264, %p265
      %p267 = scmp.ne.s32.totalorder %s256, %s257
      %p268 = scmp.eq.s32.totalorder %s26, 0
      %p269 = por %p267, %p268
      %p270 = scmp.ne.s32.totalorder %s256, %s257
      %p271 = scmp.eq.s32.totalorder %s27, 3
      %p272 = por %p270, %p271
      %p274 = scmp.ne.s32.totalorder %s257, %s273
      %p275 = scmp.eq.s32.totalorder %s27, 0
      %p276 = por %p274, %p275
      %p277 = scmp.le.s32.totalorder 1, %s21
      %p278 = scmp.lt.s32.totalorder %s21, 5
      %p279 = pnand %p277, %p278
      %p280 = pneg %p279
      // Predicated region
      $region9: #{tpu_custom_call.1} parent=5 // pred_check
        _
      $region10: #{tpu_custom_call.1} parent=5 // pred_check_branch
        %282 = sbr.rel (%p279) target = $region12
      $region11: #{tpu_custom_call.1} parent=5 // pred_region
        %s283 = ssub.s32 %s21, 1
      $region12: #{tpu_custom_call.1} parent=5 // pred_fallthru
        _
      %p284 = scmp.lt.s32.totalorder %s21, 4
      // Predicated region
      $region13: #{tpu_custom_call.1} parent=5 // pred_check
        %p285 = pneg %p284
      $region14: #{tpu_custom_call.1} parent=5 // pred_check_branch
        %287 = sbr.rel (%p285) target = $region16
      $region15: #{tpu_custom_call.1} parent=5 // pred_region
        // Predicated region
        $region17: #{tpu_custom_call.1} parent=15 // pred_check
          %p288 = pneg %p53
        $region18: #{tpu_custom_call.1} parent=15 // pred_check_branch
          %290 = sbr.rel (%p288) target = $region20
        $region19: #{tpu_custom_call.1} parent=15 // pred_region
          %p291 = scmp.lt.s32.totalorder %s28, 1
          %s292 = scalar_select %p291, %s28, 1
          %s293 = smul.addr %s292, 8
          %s294 = scalar_lea.vmem %s0, %s293
        $region20: #{tpu_custom_call.1} parent=15 // pred_fallthru
          _
        // Predicated region
        $region21: #{tpu_custom_call.1} parent=15 // pred_check
          %p295 = pneg %p79
        $region22: #{tpu_custom_call.1} parent=15 // pred_check_branch
          %297 = sbr.rel (%p295) target = $region24
        $region23: #{tpu_custom_call.1} parent=15 // pred_region
          %p298 = scmp.lt.s32.totalorder %s29, 1
          %s299 = scalar_select %p298, %s29, 1
          %s300 = smul.addr %s299, 4
          %s301 = smul.addr %s300, 4
          %s302 = scalar_lea.vmem %s1, %s301
        $region24: #{tpu_custom_call.1} parent=15 // pred_fallthru
          _
        // Predicated region
        $region25: #{tpu_custom_call.1} parent=15 // pred_check
          %p303 = pneg %p105
        $region26: #{tpu_custom_call.1} parent=15 // pred_check_branch
          %305 = sbr.rel (%p303) target = $region28
        $region27: #{tpu_custom_call.1} parent=15 // pred_region
          %p306 = scmp.lt.s32.totalorder %s29, 1
          %s307 = scalar_select %p306, %s29, 1
          %s308 = smul.addr %s307, 4
          %s309 = smul.addr %s308, 4
          %s310 = scalar_lea.vmem %s2, %s309
        $region28: #{tpu_custom_call.1} parent=15 // pred_fallthru
          _
        // Predicated region
        $region29: #{tpu_custom_call.1} parent=15 // pred_check
          %p311 = pneg %p131
        $region30: #{tpu_custom_call.1} parent=15 // pred_check_branch
          %313 = sbr.rel (%p311) target = $region32
        $region31: #{tpu_custom_call.1} parent=15 // pred_region
          %p314 = scmp.lt.s32.totalorder %s29, 1
          %s315 = scalar_select %p314, %s29, 1
          %s316 = smul.addr %s315, 4
          %s317 = smul.addr %s316, 4
          %s318 = scalar_lea.vmem %s3, %s317
        $region32: #{tpu_custom_call.1} parent=15 // pred_fallthru
          _
        // Predicated region
        $region33: #{tpu_custom_call.1} parent=15 // pred_check
          %p319 = pneg %p157
        $region34: #{tpu_custom_call.1} parent=15 // pred_check_branch
          %321 = sbr.rel (%p319) target = $region36
        $region35: #{tpu_custom_call.1} parent=15 // pred_region
          %p322 = scmp.lt.s32.totalorder %s29, 1
          %s323 = scalar_select %p322, %s29, 1
          %s324 = smul.addr %s323, 8
          %s325 = smul.addr %s324, 4
          %s326 = scalar_lea.vmem %s4, %s325
        $region36: #{tpu_custom_call.1} parent=15 // pred_fallthru
          _
        // Predicated region
        $region37: #{tpu_custom_call.1} parent=15 // pred_check
          %p327 = pneg %p183
        $region38: #{tpu_custom_call.1} parent=15 // pred_check_branch
          %329 = sbr.rel (%p327) target = $region40
        $region39: #{tpu_custom_call.1} parent=15 // pred_region
          %p330 = scmp.lt.s32.totalorder %s29, 1
          %s331 = scalar_select %p330, %s29, 1
          %s332 = smul.addr %s331, 2
          %s333 = smul.addr %s332, 8
          %s334 = scalar_lea.vmem %s5, %s333
        $region40: #{tpu_custom_call.1} parent=15 // pred_fallthru
          _
        // Predicated region
        $region41: #{tpu_custom_call.1} parent=15 // pred_check
          %p335 = pneg %p209
        $region42: #{tpu_custom_call.1} parent=15 // pred_check_branch
          %337 = sbr.rel (%p335) target = $region44
        $region43: #{tpu_custom_call.1} parent=15 // pred_region
          %p338 = scmp.lt.s32.totalorder %s29, 1
          %s339 = scalar_select %p338, %s29, 1
          %s340 = scalar_lea.vmem %s6, %s339
        $region44: #{tpu_custom_call.1} parent=15 // pred_fallthru
          _
      $region16: #{tpu_custom_call.1} parent=5 // pred_fallthru
        _
      %p341 = scmp.le.s32.totalorder 1, %s21
      %p342 = scmp.lt.s32.totalorder %s21, 5
      %p343 = pnand %p341, %p342
      %p344 = pneg %p343
      // Predicated region
      $region45: #{tpu_custom_call.1} parent=5 // pred_check
        _
      $region46: #{tpu_custom_call.1} parent=5 // pred_check_branch
        %346 = sbr.rel (%p343) target = $region48
      $region47: #{tpu_custom_call.1} parent=5 // pred_region
        %s347 = ssub.s32 %s21, 1
        %p348 = scmp.lt.s32.totalorder %s30, 1
        %s349 = scalar_select %p348, %s30, 1
        %s350 = smul.addr %s349, 8
        %s351 = scalar_lea.vmem %s0, %s350
        %p352 = pneg %p59
        %p353 = pneg %p56
        %p354 = scmp.lt.s32.totalorder %s31, 1
        %s355 = scalar_select %p354, %s31, 1
        %s356 = smul.addr %s355, 4
        %s357 = smul.addr %s356, 4
        %s358 = scalar_lea.vmem %s1, %s357
        %p359 = pneg %p85
        %p360 = pneg %p82
        %p361 = scmp.lt.s32.totalorder %s31, 1
        %s362 = scalar_select %p361, %s31, 1
        %s363 = smul.addr %s362, 4
        %s364 = smul.addr %s363, 4
        %s365 = scalar_lea.vmem %s2, %s364
        %p366 = pneg %p111
        %p367 = pneg %p108
        %p368 = scmp.lt.s32.totalorder %s31, 1
        %s369 = scalar_select %p368, %s31, 1
        %s370 = smul.addr %s369, 4
        %s371 = smul.addr %s370, 4
        %s372 = scalar_lea.vmem %s3, %s371
        %p373 = pneg %p137
        %p374 = pneg %p134
        %p375 = scmp.lt.s32.totalorder %s31, 1
        %s376 = scalar_select %p375, %s31, 1
        %s377 = smul.addr %s376, 8
        %s378 = smul.addr %s377, 4
        %s379 = scalar_lea.vmem %s4, %s378
        %p380 = pneg %p163
        %p381 = pneg %p160
        %p382 = scmp.lt.s32.totalorder %s31, 1
        %s383 = scalar_select %p382, %s31, 1
        %s384 = smul.addr %s383, 2
        %s385 = smul.addr %s384, 8
        %s386 = scalar_lea.vmem %s5, %s385
        %p387 = pneg %p189
        %p388 = pneg %p186
        %p389 = scmp.lt.s32.totalorder %s31, 1
        %s390 = scalar_select %p389, %s31, 1
        %s391 = scalar_lea.vmem %s6, %s390
        %p392 = pneg %p215
        %p393 = pneg %p212
        %p394 = pneg %p241
        %p395 = pneg %p238
        %s396 = sand.u32 %s228, 1
        %s397 = scalar_lea.sflag [#allocation5], %s396
        %s398 = sand.u32 %s228, 1
        %s399 = smul.addr %s398, 8
        %s400 = scalar_lea.vmem [#allocation4], %s399
        %p401 = pneg %p269
        %p402 = pneg %p266
        %s403 = sand.u32 %s256, 1
        %s404 = scalar_lea.sflag [#allocation7], %s403
        %s405 = sand.u32 %s256, 1
        %s406 = smul.addr %s405, 32
        %s407 = scalar_lea.vmem [#allocation6], %s406
        %p408 = scmp.lt.s32.totalorder %s30, 1
        %s409 = scalar_select %p408, %s30, 1
        %s410 = smul.addr %s409, 8
        %s411 = scalar_lea.vmem %s0, %s410
        %p412 = scmp.lt.s32.totalorder %s31, 1
        %s413 = scalar_select %p412, %s31, 1
        %s414 = smul.addr %s413, 4
        %s415 = smul.addr %s414, 4
        %s416 = scalar_lea.vmem %s1, %s415
        %p417 = scmp.lt.s32.totalorder %s31, 1
        %s418 = scalar_select %p417, %s31, 1
        %s419 = smul.addr %s418, 4
        %s420 = smul.addr %s419, 4
        %s421 = scalar_lea.vmem %s2, %s420
        %p422 = scmp.lt.s32.totalorder %s31, 1
        %s423 = scalar_select %p422, %s31, 1
        %s424 = smul.addr %s423, 4
        %s425 = smul.addr %s424, 4
        %s426 = scalar_lea.vmem %s3, %s425
        %p427 = scmp.lt.s32.totalorder %s31, 1
        %s428 = scalar_select %p427, %s31, 1
        %s429 = smul.addr %s428, 8
        %s430 = smul.addr %s429, 4
        %s431 = scalar_lea.vmem %s4, %s430
        %p432 = scmp.lt.s32.totalorder %s31, 1
        %s433 = scalar_select %p432, %s31, 1
        %s434 = smul.addr %s433, 2
        %s435 = smul.addr %s434, 8
        %s436 = scalar_lea.vmem %s5, %s435
        %p437 = scmp.lt.s32.totalorder %s31, 1
        %s438 = scalar_select %p437, %s31, 1
        %s439 = scalar_lea.vmem %s6, %s438
        %p441 = scmp.eq.s32.totalorder %s31, 0
        // Predicated region
        $region49: #{tpu_custom_call.1} parent=47 // pred_check
          %p442 = pneg %p441
        $region50: #{tpu_custom_call.1} parent=47 // pred_check_branch
          %444 = sbr.rel (%p442) target = $region52
        $region51: #{tpu_custom_call.1} parent=47 // pred_region
          %v445 = vld [vmem:[%s411] sm:$0xff]
          %vm446 = vcmask 261120
          %447 = vst.msk [vmem:[#allocation2] sm:$0xff] %vm446, %v445
        $region52: #{tpu_custom_call.1} parent=47 // pred_fallthru
          _
        %v448 = vld [vmem:[#allocation2] sm:$0xff]
        %v449 = vld [vmem:[%s436] sm:$0xff]
        %v450 = vld [vmem:[%s436 + $0x8] sm:$0x1]
        %vm451 = vcmask 261120
        %v452 = vsel %vm451, %v448, 0.0
        %453 = vadd.xlane.f32.xlu0 %v452
        %v454 = vpop.xlane.xlu0 %453
        %v455 = vrcp.pop 32.0
        %v456 = vmul.f32 32.0, %v455
        %v457 = vsub.f32 1.0, %v456
        %v458 = vmul.f32 %v455, %v457
        %v459 = vadd.f32 %v455, %v458
        %vm460 = vweird.f32 %v455
        %v461 = vsel %vm460, %v455, %v459
        %v462 = vmul.f32 %v454, %v461
        %v463 = vsub.f32 %v448, %v462
        %v464 = vmul.f32 %v463, %v463
        %v465 = vsel %vm451, %v464, 0.0
        %466 = vadd.xlane.f32.xlu0 %v465
        %v467 = vpop.xlane.xlu0 %466
        %v468 = vmul.f32 %v467, %v461
        %v469 = vadd.f32 %v468, 1e-05
        %v470 = vrsqrt.pop %v469
        %v471 = vmul.f32 %v470, %v469
        %v472 = vmul.f32 %v471, %v470
        %v473 = vmul.f32 0.5, %v472
        %v474 = vsub.f32 1.5, %v473
        %v475 = vmul.f32 %v470, %v474
        %vm476 = vweird.f32 %v469
        %vm477 = vweird.f32 %v470
        %vm478 = vmor %vm476, %vm477
        %v479 = vsel %vm478, %v470, %v475
        %v480 = vmul.f32 %v463, %v479
        %v481 = vperm.slane %v449, 4
        %v482 = vmul.f32 %v480, %v481
        %v483 = vperm.slane %v449, 5
        %v484 = vadd.f32 %v482, %v483
        %v485 = vpack.c.bf16 %v484, %v484
        %v486 = vld [vmem:[%s416] sm:$0xf]
        %v487 = vld [vmem:[%s416 + $0x4] sm:$0xf]
        %v488 = vld [vmem:[%s416 + $0x8] sm:$0xf]
        %v489 = vld [vmem:[%s416 + $0xc] sm:$0xf]
        %v494 = vunpack.c.l.b16 %v486
        %v495 = vunpack.c.l.b16 %v487
        %v496 = vunpack.c.l.b16 %v488
        %v497 = vunpack.c.l.b16 %v489
        %v498 = vpack.c.b16 %v495, %v494
        %v499 = vpack.c.b16 %v497, %v496
        %v503 = vsel %vm451, %v485, 0
        %505 = vmatpush.bf16.msra.mxu0 0
        %506 = vmatpush.bf16.msra.mxu0 0
        %507 = vmatpush.bf16.msra.mxu0 0
        %508 = vmatpush.bf16.msra.mxu0 0
        %509 = vmatpush.bf16.msra.mxu0 0
        %510 = vmatpush.bf16.msra.mxu0 0
        %511 = vmatpush.bf16.msra.mxu0 %v499
        %512 = vmatpush.bf16.msra.mxu0 %v498
        %513 = vmatmul.bf16.gmra.mxu0 %v503
        %v514 = vpop.f32.mrf.mxu0
        %v515 = vadd.f32 0.0, %v514
        %v516 = vpop.f32.mrf.mxu0
        %517 = vdwg.mxu0
        %v518 = vperm.slane %v449, 0
        %v519 = vadd.f32 %v515, %v518
        %v520 = vpack.c.bf16 %v519, %v519
        %v521 = vperm.slane %v449, 1
        %523 = vrot.lane.b32.xlu0 %v521, 32
        %v524 = vpop.permute.xlu0 %523
        %v526 = vadd.f32 %v515, %v524
        %v527 = vpack.c.bf16 %v526, %v526
        %v528 = vperm.slane %v449, 2
        %530 = vrot.lane.b32.xlu0 %v528, 64
        %v531 = vpop.permute.xlu0 %530
        %v533 = vadd.f32 %v515, %v531
        %v534 = vpack.c.bf16 %v533, %v533
        %536 = vrot.lane.b32.xlu0 %v520, 120
        %v537 = vpop.permute.xlu0 %536
        %538 = vrot.lane.b32.xlu0 %v520, 112
        %v539 = vpop.permute.xlu0 %538
        %540 = vrot.lane.b32.xlu0 %v520, 104
        %v541 = vpop.permute.xlu0 %540
        %543 = vrot.lane.b32.xlu0 %v527, 120
        %v544 = vpop.permute.xlu0 %543
        %545 = vrot.lane.b32.xlu0 %v527, 112
        %v546 = vpop.permute.xlu0 %545
        %547 = vrot.lane.b32.xlu0 %v527, 104
        %v548 = vpop.permute.xlu0 %547
        %550 = vrot.lane.b32.xlu0 %v534, 120
        %v551 = vpop.permute.xlu0 %550
        %552 = vrot.lane.b32.xlu0 %v534, 112
        %v553 = vpop.permute.xlu0 %552
        %554 = vrot.lane.b32.xlu0 %v534, 104
        %v555 = vpop.permute.xlu0 %554
        %v556 = vunpack.c.l.b16 %v527
        %v557 = vpack.c.b16 %v556, %v556
        %558 = vrot.lane.b32.xlu0 %v557, 96
        %v559 = vpop.permute.xlu0 %558
        %vm560 = vcmask 64512
        %v562 = vsel %vm560, %v520, 0
        %v565 = vsel %vm560, %v559, 0
        %567 = vmatpush.bf16.xpose.msra.mxu0 0
        %568 = vmatpush.bf16.xpose.msra.mxu0 0
        %569 = vmatpush.bf16.xpose.msra.mxu0 0
        %570 = vmatpush.bf16.xpose.msra.mxu0 0
        %571 = vmatpush.bf16.xpose.msra.mxu0 0
        %572 = vmatpush.bf16.xpose.msra.mxu0 0
        %573 = vmatpush.bf16.xpose.msra.mxu0 0
        %574 = vmatpush.bf16.xpose.msra.mxu0 %v565
        %575 = vmatmul.bf16.gmra.mxu0 %v562
        %v576 = vpop.f32.mrf.mxu0
        %v577 = vadd.f32 0.0, %v576
        %v578 = vpop.f32.mrf.mxu0
        %579 = vdwg.mxu0
        %v580 = vunpack.c.l.b16 %v544
        %v581 = vpack.c.b16 %v580, %v580
        %582 = vrot.lane.b32.xlu0 %v581, 96
        %v583 = vpop.permute.xlu0 %582
        %v585 = vsel %vm560, %v537, 0
        %v588 = vsel %vm560, %v583, 0
        %590 = vmatpush.bf16.xpose.msra.mxu0 0
        %591 = vmatpush.bf16.xpose.msra.mxu0 0
        %592 = vmatpush.bf16.xpose.msra.mxu0 0
        %593 = vmatpush.bf16.xpose.msra.mxu0 0
        %594 = vmatpush.bf16.xpose.msra.mxu0 0
        %595 = vmatpush.bf16.xpose.msra.mxu0 0
        %596 = vmatpush.bf16.xpose.msra.mxu0 0
        %597 = vmatpush.bf16.xpose.msra.mxu0 %v588
        %598 = vmatmul.bf16.gmra.mxu0 %v585
        %v599 = vpop.f32.mrf.mxu0
        %v600 = vadd.f32 0.0, %v599
        %v601 = vpop.f32.mrf.mxu0
        %602 = vdwg.mxu0
        %v603 = vunpack.c.l.b16 %v546
        %v604 = vpack.c.b16 %v603, %v603
        %605 = vrot.lane.b32.xlu0 %v604, 96
        %v606 = vpop.permute.xlu0 %605
        %v608 = vsel %vm560, %v539, 0
        %v611 = vsel %vm560, %v606, 0
        %613 = vmatpush.bf16.xpose.msra.mxu0 0
        %614 = vmatpush.bf16.xpose.msra.mxu0 0
        %615 = vmatpush.bf16.xpose.msra.mxu0 0
        %616 = vmatpush.bf16.xpose.msra.mxu0 0
        %617 = vmatpush.bf16.xpose.msra.mxu0 0
        %618 = vmatpush.bf16.xpose.msra.mxu0 0
        %619 = vmatpush.bf16.xpose.msra.mxu0 0
        %620 = vmatpush.bf16.xpose.msra.mxu0 %v611
        %621 = vmatmul.bf16.gmra.mxu0 %v608
        %v622 = vpop.f32.mrf.mxu0
        %v623 = vadd.f32 0.0, %v622
        %v624 = vpop.f32.mrf.mxu0
        %625 = vdwg.mxu0
        %v626 = vunpack.c.l.b16 %v548
        %v627 = vpack.c.b16 %v626, %v626
        %628 = vrot.lane.b32.xlu0 %v627, 96
        %v629 = vpop.permute.xlu0 %628
        %v631 = vsel %vm560, %v541, 0
        %v634 = vsel %vm560, %v629, 0
        %636 = vmatpush.bf16.xpose.msra.mxu0 0
        %637 = vmatpush.bf16.xpose.msra.mxu0 0
        %638 = vmatpush.bf16.xpose.msra.mxu0 0
        %639 = vmatpush.bf16.xpose.msra.mxu0 0
        %640 = vmatpush.bf16.xpose.msra.mxu0 0
        %641 = vmatpush.bf16.xpose.msra.mxu0 0
        %642 = vmatpush.bf16.xpose.msra.mxu0 0
        %643 = vmatpush.bf16.xpose.msra.mxu0 %v634
        %644 = vmatmul.bf16.gmra.mxu0 %v631
        %v645 = vpop.f32.mrf.mxu0
        %v646 = vadd.f32 0.0, %v645
        %v647 = vpop.f32.mrf.mxu0
        %648 = vdwg.mxu0
        %v649 = vmul.f32 %v577, 0.35355338
        %v650 = vmul.f32 %v600, 0.35355338
        %v651 = vmul.f32 %v623, 0.35355338
        %v652 = vmul.f32 %v646, 0.35355338
        %v653 = vsel %vm560, %v649, -inf
        %654 = vmax.xlane.f32.xlu0 %v653
        %v655 = vpop.xlane.xlu0 %654
        %v656 = vsel %vm560, %v650, -inf
        %657 = vmax.xlane.f32.xlu0 %v656
        %v658 = vpop.xlane.xlu0 %657
        %v659 = vsel %vm560, %v651, -inf
        %660 = vmax.xlane.f32.xlu0 %v659
        %v661 = vpop.xlane.xlu0 %660
        %v662 = vsel %vm560, %v652, -inf
        %663 = vmax.xlane.f32.xlu0 %v662
        %v664 = vpop.xlane.xlu0 %663
        %v665 = vsub.f32 %v649, %v655
        %v666 = vsub.f32 %v650, %v658
        %v667 = vsub.f32 %v651, %v661
        %v668 = vsub.f32 %v652, %v664
        %v669 = vmul.f32 %v665, 1.442695
        %v670 = vpow.pop %v669
        %v671 = vmul.f32 %v666, 1.442695
        %v672 = vpow.pop %v671
        %v673 = vmul.f32 %v667, 1.442695
        %v674 = vpow.pop %v673
        %v675 = vmul.f32 %v668, 1.442695
        %v676 = vpow.pop %v675
        %v677 = vsel %vm560, %v670, 0.0
        %678 = vadd.xlane.f32.xlu0 %v677
        %v679 = vpop.xlane.xlu0 %678
        %v680 = vsel %vm560, %v672, 0.0
        %681 = vadd.xlane.f32.xlu0 %v680
        %v682 = vpop.xlane.xlu0 %681
        %v683 = vsel %vm560, %v674, 0.0
        %684 = vadd.xlane.f32.xlu0 %v683
        %v685 = vpop.xlane.xlu0 %684
        %v686 = vsel %vm560, %v676, 0.0
        %687 = vadd.xlane.f32.xlu0 %v686
        %v688 = vpop.xlane.xlu0 %687
        %v689 = vrcp.pop %v679
        %v690 = vmul.f32 %v679, %v689
        %v691 = vsub.f32 1.0, %v690
        %v692 = vmul.f32 %v689, %v691
        %v693 = vadd.f32 %v689, %v692
        %vm694 = vweird.f32 %v679
        %vm695 = vweird.f32 %v689
        %vm696 = vmor %vm694, %vm695
        %v697 = vsel %vm696, %v689, %v693
        %v698 = vand.u32 2147483647, %v679
        %vm699 = vcmp.eq.f32.partialorder %v698, 8.507059e+37
        %v700 = vand.u32 %v679, 2147483648
        %v701 = vor.u32 1.1754944e-38, %v700
        %v702 = vsel %vm699, %v701, %v697
        %v703 = vmul.f32 %v670, %v702
        %v704 = vrcp.pop %v682
        %v705 = vmul.f32 %v682, %v704
        %v706 = vsub.f32 1.0, %v705
        %v707 = vmul.f32 %v704, %v706
        %v708 = vadd.f32 %v704, %v707
        %vm709 = vweird.f32 %v682
        %vm710 = vweird.f32 %v704
        %vm711 = vmor %vm709, %vm710
        %v712 = vsel %vm711, %v704, %v708
        %v713 = vand.u32 2147483647, %v682
        %vm714 = vcmp.eq.f32.partialorder %v713, 8.507059e+37
        %v715 = vand.u32 %v682, 2147483648
        %v716 = vor.u32 1.1754944e-38, %v715
        %v717 = vsel %vm714, %v716, %v712
        %v718 = vmul.f32 %v672, %v717
        %v719 = vrcp.pop %v685
        %v720 = vmul.f32 %v685, %v719
        %v721 = vsub.f32 1.0, %v720
        %v722 = vmul.f32 %v719, %v721
        %v723 = vadd.f32 %v719, %v722
        %vm724 = vweird.f32 %v685
        %vm725 = vweird.f32 %v719
        %vm726 = vmor %vm724, %vm725
        %v727 = vsel %vm726, %v719, %v723
        %v728 = vand.u32 2147483647, %v685
        %vm729 = vcmp.eq.f32.partialorder %v728, 8.507059e+37
        %v730 = vand.u32 %v685, 2147483648
        %v731 = vor.u32 1.1754944e-38, %v730
        %v732 = vsel %vm729, %v731, %v727
        %v733 = vmul.f32 %v674, %v732
        %v734 = vrcp.pop %v688
        %v735 = vmul.f32 %v688, %v734
        %v736 = vsub.f32 1.0, %v735
        %v737 = vmul.f32 %v734, %v736
        %v738 = vadd.f32 %v734, %v737
        %vm739 = vweird.f32 %v688
        %vm740 = vweird.f32 %v734
        %vm741 = vmor %vm739, %vm740
        %v742 = vsel %vm741, %v734, %v738
        %v743 = vand.u32 2147483647, %v688
        %vm744 = vcmp.eq.f32.partialorder %v743, 8.507059e+37
        %v745 = vand.u32 %v688, 2147483648
        %v746 = vor.u32 1.1754944e-38, %v745
        %v747 = vsel %vm744, %v746, %v742
        %v748 = vmul.f32 %v676, %v747
        %749 = vst.msk [vmem:[%s407] sm:$0xff] %vm560, %v703
        %750 = vst.msk [vmem:[%s407 + $0x8] sm:$0xff] %vm560, %v718
        %751 = vst.msk [vmem:[%s407 + $0x10] sm:$0xff] %vm560, %v733
        %752 = vst.msk [vmem:[%s407 + $0x18] sm:$0xff] %vm560, %v748
        %v753 = vpack.c.bf16 %v703, %v703
        %v754 = vpack.c.bf16 %v718, %v718
        %v755 = vpack.c.bf16 %v733, %v733
        %v756 = vpack.c.bf16 %v748, %v748
        %v757 = vunpack.c.l.b16 %v534
        %v758 = vpack.c.b16 %v757, %v757
        %759 = vrot.lane.b32.xlu0 %v758, 64
        %v760 = vpop.permute.xlu0 %759
        %v762 = vsel %vm560, %v753, 0
        %vm764 = vcmask 1043456
        %v766 = vsel %vm764, %v760, 0
        %768 = vmatpush.bf16.msra.mxu0 0
        %769 = vmatpush.bf16.msra.mxu0 0
        %770 = vmatpush.bf16.msra.mxu0 0
        %771 = vmatpush.bf16.msra.mxu0 0
        %772 = vmatpush.bf16.msra.mxu0 0
        %773 = vmatpush.bf16.msra.mxu0 0
        %774 = vmatpush.bf16.msra.mxu0 0
        %775 = vmatpush.bf16.msra.mxu0 %v766
        %776 = vmatmul.bf16.gmra.mxu0 %v762
        %v777 = vpop.f32.mrf.mxu0
        %v778 = vadd.f32 0.0, %v777
        %v779 = vpop.f32.mrf.mxu0
        %780 = vdwg.mxu0
        %v781 = vunpack.c.l.b16 %v551
        %v782 = vpack.c.b16 %v781, %v781
        %783 = vrot.lane.b32.xlu0 %v782, 64
        %v784 = vpop.permute.xlu0 %783
        %v786 = vsel %vm560, %v754, 0
        %v789 = vsel %vm764, %v784, 0
        %791 = vmatpush.bf16.msra.mxu0 0
        %792 = vmatpush.bf16.msra.mxu0 0
        %793 = vmatpush.bf16.msra.mxu0 0
        %794 = vmatpush.bf16.msra.mxu0 0
        %795 = vmatpush.bf16.msra.mxu0 0
        %796 = vmatpush.bf16.msra.mxu0 0
        %797 = vmatpush.bf16.msra.mxu0 0
        %798 = vmatpush.bf16.msra.mxu0 %v789
        %799 = vmatmul.bf16.gmra.mxu0 %v786
        %v800 = vpop.f32.mrf.mxu0
        %v801 = vadd.f32 0.0, %v800
        %v802 = vpop.f32.mrf.mxu0
        %803 = vdwg.mxu0
        %v804 = vunpack.c.l.b16 %v553
        %v805 = vpack.c.b16 %v804, %v804
        %806 = vrot.lane.b32.xlu0 %v805, 64
        %v807 = vpop.permute.xlu0 %806
        %v809 = vsel %vm560, %v755, 0
        %v812 = vsel %vm764, %v807, 0
        %814 = vmatpush.bf16.msra.mxu0 0
        %815 = vmatpush.bf16.msra.mxu0 0
        %816 = vmatpush.bf16.msra.mxu0 0
        %817 = vmatpush.bf16.msra.mxu0 0
        %818 = vmatpush.bf16.msra.mxu0 0
        %819 = vmatpush.bf16.msra.mxu0 0
        %820 = vmatpush.bf16.msra.mxu0 0
        %821 = vmatpush.bf16.msra.mxu0 %v812
        %822 = vmatmul.bf16.gmra.mxu0 %v809
        %v823 = vpop.f32.mrf.mxu0
        %v824 = vadd.f32 0.0, %v823
        %v825 = vpop.f32.mrf.mxu0
        %826 = vdwg.mxu0
        %v827 = vunpack.c.l.b16 %v555
        %v828 = vpack.c.b16 %v827, %v827
        %829 = vrot.lane.b32.xlu0 %v828, 64
        %v830 = vpop.permute.xlu0 %829
        %v832 = vsel %vm560, %v756, 0
        %v835 = vsel %vm764, %v830, 0
        %837 = vmatpush.bf16.msra.mxu0 0
        %838 = vmatpush.bf16.msra.mxu0 0
        %839 = vmatpush.bf16.msra.mxu0 0
        %840 = vmatpush.bf16.msra.mxu0 0
        %841 = vmatpush.bf16.msra.mxu0 0
        %842 = vmatpush.bf16.msra.mxu0 0
        %843 = vmatpush.bf16.msra.mxu0 0
        %844 = vmatpush.bf16.msra.mxu0 %v835
        %845 = vmatmul.bf16.gmra.mxu0 %v832
        %v846 = vpop.f32.mrf.mxu0
        %v847 = vadd.f32 0.0, %v846
        %v848 = vpop.f32.mrf.mxu0
        %849 = vdwg.mxu0
        %v850 = vpack.c.bf16 %v778, %v778
        %vm851 = vcmask 60416
        %852 = vst.msk [vmem:[#allocation3] sm:$0xf] %vm851, %v850
        %v853 = vpack.c.bf16 %v801, %v801
        %855 = vrot.lane.b32.xlu0 %v853, 8
        %v856 = vpop.permute.xlu0 %855
        %vm858 = vcmask 126016
        %859 = vst.msk [vmem:[#allocation3] sm:$0xf] %vm858, %v856
        %v860 = vpack.c.bf16 %v824, %v824
        %862 = vrot.lane.b32.xlu0 %v860, 16
        %v863 = vpop.permute.xlu0 %862
        %vm865 = vcmask 191616
        %866 = vst.msk [vmem:[#allocation3] sm:$0xf] %vm865, %v863
        %v867 = vpack.c.bf16 %v847, %v847
        %869 = vrot.lane.b32.xlu0 %v867, 24
        %v870 = vpop.permute.xlu0 %869
        %vm872 = vcmask 257216
        %873 = vst.msk [vmem:[#allocation3] sm:$0xf] %vm872, %v870
        %v874 = vld [vmem:[#allocation3] sm:$0xf]
        %v875 = vld [vmem:[%s421] sm:$0xf]
        %v876 = vld [vmem:[%s421 + $0x4] sm:$0xf]
        %v877 = vld [vmem:[%s421 + $0x8] sm:$0xf]
        %v878 = vld [vmem:[%s421 + $0xc] sm:$0xf]
        %v879 = vperm.slane %v449, 3
        %v884 = vunpack.c.l.b16 %v875
        %v885 = vunpack.c.l.b16 %v876
        %v886 = vunpack.c.l.b16 %v877
        %v887 = vunpack.c.l.b16 %v878
        %v888 = vpack.c.b16 %v885, %v884
        %v889 = vpack.c.b16 %v887, %v886
        %v893 = vsel %vm451, %v874, 0
        %895 = vmatpush.bf16.msra.mxu0 0
        %896 = vmatpush.bf16.msra.mxu0 0
        %897 = vmatpush.bf16.msra.mxu0 0
        %898 = vmatpush.bf16.msra.mxu0 0
        %899 = vmatpush.bf16.msra.mxu0 0
        %900 = vmatpush.bf16.msra.mxu0 0
        %901 = vmatpush.bf16.msra.mxu0 %v889
        %902 = vmatpush.bf16.msra.mxu0 %v888
        %903 = vmatmul.bf16.gmra.mxu0 %v893
        %v904 = vpop.f32.mrf.mxu0
        %v905 = vadd.f32 %v879, %v904
        %v906 = vpop.f32.mrf.mxu0
        %907 = vdwg.mxu0
        %v908 = vadd.f32 %v448, %v905
        %v909 = vsel %vm451, %v908, 0.0
        %910 = vadd.xlane.f32.xlu0 %v909
        %v911 = vpop.xlane.xlu0 %910
        %v912 = vmul.f32 %v911, %v461
        %v913 = vsub.f32 %v908, %v912
        %v914 = vmul.f32 %v913, %v913
        %v915 = vsel %vm451, %v914, 0.0
        %916 = vadd.xlane.f32.xlu0 %v915
        %v917 = vpop.xlane.xlu0 %916
        %v918 = vmul.f32 %v917, %v461
        %v919 = vadd.f32 %v918, 1e-05
        %v920 = vrsqrt.pop %v919
        %v921 = vmul.f32 %v920, %v919
        %v922 = vmul.f32 %v921, %v920
        %v923 = vmul.f32 0.5, %v922
        %v924 = vsub.f32 1.5, %v923
        %v925 = vmul.f32 %v920, %v924
        %vm926 = vweird.f32 %v919
        %vm927 = vweird.f32 %v920
        %vm928 = vmor %vm926, %vm927
        %v929 = vsel %vm928, %v920, %v925
        %v930 = vmul.f32 %v913, %v929
        %v931 = vperm.slane %v449, 6
        %v932 = vmul.f32 %v930, %v931
        %v933 = vperm.slane %v449, 7
        %v934 = vadd.f32 %v932, %v933
        %v935 = vpack.c.bf16 %v934, %v934
        %v936 = vld [vmem:[%s426] sm:$0xf]
        %v937 = vld [vmem:[%s426 + $0x4] sm:$0xf]
        %v938 = vld [vmem:[%s426 + $0x8] sm:$0xf]
        %v939 = vld [vmem:[%s426 + $0xc] sm:$0xf]
        %v940 = vld [vmem:[%s439] sm:$0x1]
        %v942 = vperm.slane %v940, 0
        %v948 = vunpack.c.l.b16 %v936
        %v949 = vunpack.c.l.b16 %v937
        %v950 = vunpack.c.l.b16 %v938
        %v951 = vunpack.c.l.b16 %v939
        %v952 = vpack.c.b16 %v949, %v948
        %v953 = vpack.c.b16 %v951, %v950
        %v957 = vsel %vm451, %v935, 0
        %959 = vmatpush.bf16.msra.mxu0 0
        %960 = vmatpush.bf16.msra.mxu0 0
        %961 = vmatpush.bf16.msra.mxu0 0
        %962 = vmatpush.bf16.msra.mxu0 0
        %963 = vmatpush.bf16.msra.mxu0 0
        %964 = vmatpush.bf16.msra.mxu0 0
        %965 = vmatpush.bf16.msra.mxu0 %v953
        %966 = vmatpush.bf16.msra.mxu0 %v952
        %967 = vmatmul.bf16.gmra.mxu0 %v957
        %v968 = vpop.f32.mrf.mxu0
        %v969 = vadd.f32 %v942, %v968
        %v970 = vpop.f32.mrf.mxu0
        %971 = vdwg.mxu0
        %v972 = vmul.f32 %v969, 0.5
        %v973 = vmul.f32 %v969, 0.70710677
        %v974 = vmul.f32 %v973, %v973
        %v975 = vmin.f32 16.0, %v974
        %v976 = vmul.f32 %v975, 2.1237322e-06
        %v977 = vadd.f32 %v976, 0.00028619796
        %v978 = vmul.f32 %v975, %v977
        %v979 = vadd.f32 %v978, 0.0036580483
        %v980 = vmul.f32 %v975, %v979
        %v981 = vadd.f32 %v980, 0.05243302
        %v982 = vmul.f32 %v975, %v981
        %v983 = vadd.f32 %v982, 0.18741608
        %v984 = vmul.f32 %v975, %v983
        %v985 = vadd.f32 %v984, 1.1283791
        %v986 = vmul.f32 %v973, %v985
        %v987 = vmul.f32 %v975, 3.8918573e-05
        %v988 = vadd.f32 %v987, 0.001143296
        %v989 = vmul.f32 %v975, %v988
        %v990 = vadd.f32 %v989, 0.014752088
        %v991 = vmul.f32 %v975, %v990
        %v992 = vadd.f32 %v991, 0.112945676
        %v993 = vmul.f32 %v975, %v992
        %v994 = vadd.f32 %v993, 0.4994258
        %v995 = vmul.f32 %v975, %v994
        %v996 = vadd.f32 %v995, 1.0
        %v997 = vrcp.pop %v996
        %v998 = vmul.f32 %v996, %v997
        %v999 = vsub.f32 1.0, %v998
        %v1000 = vmul.f32 %v997, %v999
        %v1001 = vadd.f32 %v997, %v1000
        %vm1002 = vweird.f32 %v996
        %vm1003 = vweird.f32 %v997
        %vm1004 = vmor %vm1002, %vm1003
        %v1005 = vsel %vm1004, %v997, %v1001
        %v1006 = vand.u32 2147483647, %v996
        %vm1007 = vcmp.eq.f32.partialorder %v1006, 8.507059e+37
        %v1008 = vand.u32 %v996, 2147483648
        %v1009 = vor.u32 1.1754944e-38, %v1008
        %v1010 = vsel %vm1007, %v1009, %v1005
        %v1011 = vmul.f32 %v986, %v1010
        %v1012 = vmin.f32 %v1011, 1.0
        %v1013 = vmax.f32 %v1012, -1.0
        %v1014 = vadd.f32 %v1013, 1.0
        %v1015 = vmul.f32 %v972, %v1014
        %v1016 = vpack.c.bf16 %v1015, %v1015
        %v1017 = vld [vmem:[%s431] sm:$0xf]
        %v1018 = vld [vmem:[%s431 + $0x4] sm:$0xf]
        %v1019 = vld [vmem:[%s431 + $0x8] sm:$0xf]
        %v1020 = vld [vmem:[%s431 + $0xc] sm:$0xf]
        %v1021 = vld [vmem:[%s431 + $0x10] sm:$0xf]
        %v1022 = vld [vmem:[%s431 + $0x14] sm:$0xf]
        %v1023 = vld [vmem:[%s431 + $0x18] sm:$0xf]
        %v1024 = vld [vmem:[%s431 + $0x1c] sm:$0xf]
        %v1025 = vperm.slane %v450, 0
        %v1034 = vunpack.c.l.b16 %v1017
        %v1035 = vunpack.c.l.b16 %v1018
        %v1036 = vunpack.c.l.b16 %v1019
        %v1037 = vunpack.c.l.b16 %v1020
        %v1038 = vunpack.c.l.b16 %v1021
        %v1039 = vunpack.c.l.b16 %v1022
        %v1040 = vunpack.c.l.b16 %v1023
        %v1041 = vunpack.c.l.b16 %v1024
        %v1042 = vpack.c.b16 %v1035, %v1034
        %v1043 = vpack.c.b16 %v1037, %v1036
        %v1044 = vpack.c.b16 %v1039, %v1038
        %v1045 = vpack.c.b16 %v1041, %v1040
        %vm1050 = vcmask 523264
        %v1052 = vsel %vm1050, %v1016, 0
        %1054 = vmatpush.bf16.msra.mxu0 0
        %1055 = vmatpush.bf16.msra.mxu0 0
        %1056 = vmatpush.bf16.msra.mxu0 0
        %1057 = vmatpush.bf16.msra.mxu0 0
        %1058 = vmatpush.bf16.msra.mxu0 %v1045
        %1059 = vmatpush.bf16.msra.mxu0 %v1044
        %1060 = vmatpush.bf16.msra.mxu0 %v1043
        %1061 = vmatpush.bf16.msra.mxu0 %v1042
        %1062 = vmatmul.bf16.gmra.mxu0 %v1052
        %v1063 = vpop.f32.mrf.mxu0
        %v1064 = vadd.f32 %v1025, %v1063
        %v1065 = vpop.f32.mrf.mxu0
        %1066 = vdwg.mxu0
        %v1067 = vadd.f32 %v908, %v1064
        %1068 = vst.msk [vmem:[#allocation2] sm:$0xff] %vm451, %v1067
        %p1069 = scmp.eq.s32.totalorder %s31, 1
        // Predicated region
        $region53: #{tpu_custom_call.1} parent=47 // pred_check
          %p1070 = pneg %p1069
        $region54: #{tpu_custom_call.1} parent=47 // pred_check_branch
          %1072 = sbr.rel (%p1070) target = $region56
        $region55: #{tpu_custom_call.1} parent=47 // pred_region
          %1073 = vst.msk [vmem:[%s400] sm:$0xff] %vm451, %v1067
        $region56: #{tpu_custom_call.1} parent=47 // pred_fallthru
          _
        %s1074 = sand.u32 %s228, 1
        %s1075 = scalar_lea.sflag [#allocation5], %s1074
        %s1076 = sand.u32 %s228, 1
        %s1077 = smul.addr %s1076, 8
        %s1078 = scalar_lea.vmem [#allocation4], %s1077
        %s1079 = sand.u32 %s256, 1
        %s1080 = scalar_lea.sflag [#allocation7], %s1079
        %s1081 = sand.u32 %s256, 1
        %s1082 = smul.addr %s1081, 32
        %s1083 = scalar_lea.vmem [#allocation6], %s1082
        // Predicated region
        $region57: #{tpu_custom_call.1} parent=47 // pred_check
          %p1084 = pneg %p238
        $region58: #{tpu_custom_call.1} parent=47 // pred_check_branch
          %1086 = sbr.rel (%p1084) target = $region60
        $region59: #{tpu_custom_call.1} parent=47 // pred_region
          %1088 = vsyncadd %s1075, 0
          %s1089 = smul.addr %s30, 8
          %s1090 = scalar_lea.hbm %s7, %s1089
          %s1092 = sshll.u32 %s1078, 4
          %s1093 = int_to_ptr.vmem [resolvable:$true] %s1092
          %s1094 = sshll.u32 %s1090, 4
          %s1095 = int_to_ptr.hbm [resolvable:$true] %s1094
          %1097 = dma.vmem_to_hbm [thread:$0]  %s1093, 128, %s1095, %s1075
        $region60: #{tpu_custom_call.1} parent=47 // pred_fallthru
          _
        // Predicated region
        $region61: #{tpu_custom_call.1} parent=47 // pred_check
          %p1098 = pneg %p266
        $region62: #{tpu_custom_call.1} parent=47 // pred_check_branch
          %1100 = sbr.rel (%p1098) target = $region64
        $region63: #{tpu_custom_call.1} parent=47 // pred_region
          %1102 = vsyncadd %s1080, 0
          %s1103 = smul.addr %s30, 4
          %s1104 = smul.addr %s31, 8
          %s1105 = sadd.s32 %s1103, %s1104
          %s1106 = smul.addr %s1105, 8
          %s1107 = scalar_lea.hbm %s8, %s1106
          %s1108 = sshll.u32 %s1083, 4
          %s1109 = int_to_ptr.vmem [resolvable:$true] %s1108
          %s1110 = sshll.u32 %s1107, 4
          %s1111 = int_to_ptr.hbm [resolvable:$true] %s1110
          %1116 = dma.vmem_to_hbm [thread:$0]  %s1109, 512, %s1111, %s1080, 128, 128, 8
        $region64: #{tpu_custom_call.1} parent=47 // pred_fallthru
          _
      $region48: #{tpu_custom_call.1} parent=5 // pred_fallthru
        _
      %p1117 = scmp.le.s32.totalorder 2, %s21
      // Predicated region
      $region65: #{tpu_custom_call.1} parent=5 // pred_check
        %p1118 = pneg %p1117
      $region66: #{tpu_custom_call.1} parent=5 // pred_check_branch
        %1120 = sbr.rel (%p1118) target = $region68
      $region67: #{tpu_custom_call.1} parent=5 // pred_region
        %s1121 = ssub.s32 %s21, 2
        // Predicated region
        $region69: #{tpu_custom_call.1} parent=67 // pred_check
          %p1122 = pneg %p244
        $region70: #{tpu_custom_call.1} parent=67 // pred_check_branch
          %1124 = sbr.rel (%p1122) target = $region72
        $region71: #{tpu_custom_call.1} parent=67 // pred_region
          %s1125 = sand.u32 %s229, 1
          %s1126 = scalar_lea.sflag [#allocation5], %s1125
          %s1127 = sand.u32 %s229, 1
          %s1128 = smul.addr %s1127, 8
          %s1129 = scalar_lea.vmem [#allocation4], %s1128
          %1131 = dma.done %s1126, 128
        $region72: #{tpu_custom_call.1} parent=67 // pred_fallthru
          _
        // Predicated region
        $region73: #{tpu_custom_call.1} parent=67 // pred_check
          %p1132 = pneg %p272
        $region74: #{tpu_custom_call.1} parent=67 // pred_check_branch
          %1134 = sbr.rel (%p1132) target = $region76
        $region75: #{tpu_custom_call.1} parent=67 // pred_region
          %s1135 = sand.u32 %s257, 1
          %s1136 = scalar_lea.sflag [#allocation7], %s1135
          %s1137 = sand.u32 %s257, 1
          %s1138 = smul.addr %s1137, 32
          %s1139 = scalar_lea.vmem [#allocation6], %s1138
          %1141 = dma.done %s1136, 512
        $region76: #{tpu_custom_call.1} parent=67 // pred_fallthru
          _
      $region68: #{tpu_custom_call.1} parent=5 // pred_fallthru
        _
    $region6: #{tpu_custom_call.1} parent=1 // loop_footer
      %s25 = sadd.s32 1, %s21
    $region7: #{tpu_custom_call.1} parent=1 // loop_footer_branch
      %20 = sbr.rel target = $region3
    $region8: #{tpu_custom_call.1} parent=1 // loop_exit
      _
    %1142 = vsyncpa [#allocation5], 1
    %s1143 = scalar_lea.sflag [#allocation5], 1
    %1144 = vsyncpa %s1143, 1
    %1145 = vsyncpa [#allocation7], 1
    %s1146 = scalar_lea.sflag [#allocation7], 1
    %1147 = vsyncpa %s1146, 1

</llo_original>
